<compile_context>
chip_gen: v7x
topology: tpu7x:2x2x1
jax: 0.10.0
libtpu: 0.0.40
codegen_flags: <defaults>
</compile_context>

<pallas_src>
import math

import jax
import jax.numpy as jnp
from jax.experimental import pallas as pl
from jax.experimental.pallas import tpu as pltpu

# ----------------------------- model config (small, synthetic) ------------------------
VOCAB = 128
HIDDEN = 64
N_HEADS = 2
HEAD_DIM = HIDDEN // N_HEADS          # 32
N_LAYERS = 2
INTERMEDIATE = 128
MAX_SEQ_LEN = 32
HIDDEN_MULTIPLIER = 1.0               # DecoderOnlyModel.hidden_multiplier
RMS_EPS = 1e-6
LN_EPS = 1e-5
NEG_INF = -1e30


# ----------------------------- rotary helpers (reference semantics) -------------------
def make_rotary_tables(max_seq_len, head_dim):
    inv_freq = 1.0 / (10000.0 ** (jnp.arange(0, head_dim, 2, dtype=jnp.float32) / head_dim))
    t = jnp.arange(max_seq_len, dtype=jnp.float32)
    freqs = jnp.outer(t, inv_freq)                       # [L, Dh/2]
    emb = jnp.concatenate([freqs, freqs], axis=-1)       # [L, Dh]
    return jnp.cos(emb), jnp.sin(emb)


def slice_cos_sin(cos_tab, sin_tab, position_ids):
    """Vectorized slice_and_unsqueeze_cos_sin: cos[cache_position[i]] per batch row."""
    cos = jnp.take(cos_tab, position_ids, axis=0)        # [B, S, Dh]
    sin = jnp.take(sin_tab, position_ids, axis=0)        # [B, S, Dh]
    return cos, sin


def rotate_half_matrix():
    """[H, H] block-diagonal matrix R so that (q @ R) == rotate_half(q) per head."""
    half = HEAD_DIM // 2
    r = jnp.zeros((HEAD_DIM, HEAD_DIM), jnp.float32)
    r = r.at[jnp.arange(half) + half, jnp.arange(half)].set(-1.0)   # out[:half] = -x[half:]
    r = r.at[jnp.arange(half), jnp.arange(half) + half].set(1.0)    # out[half:] =  x[:half]
    return jnp.kron(jnp.eye(N_HEADS, dtype=jnp.float32), r)         # block-diag over heads


# ----------------------------- fused Pallas kernel --------------------------------------
def fused_decoder_kernel(x_ref, cos_ref, sin_ref, kmask_ref, rot_ref,
                         ln1_ref, wqkv_ref, wo_ref, ln2_ref, wgu_ref, wd_ref,
                         lnf_w_ref, lnf_b_ref,
                         o_ref, h_scr, bias_scr):
    """Grid = (layer,). Entire (flattened) batch resident in VMEM across all layers."""
    l = pl.program_id(0)
    B, S, _ = bias_scr.shape
    H = HIDDEN
    DH = HEAD_DIM
    BS = B * S

    # --- one-time init: resident hidden state + causal/key-padding bias -------------
    @pl.when(l == 0)
    def _init():
        h_scr[...] = x_ref[...]                              # [BS, H] f32 embeddings
        row = jax.lax.broadcasted_iota(jnp.int32, (B, S, S), 1)
        col = jax.lax.broadcasted_iota(jnp.int32, (B, S, S), 2)
        allowed = (row >= col) & (kmask_ref[...] > 0.5)      # (B,S,S) & (B,1,S)
        bias_scr[...] = jnp.where(allowed, jnp.float32(0.0), jnp.float32(NEG_INF))

    x = h_scr[...]                                           # [BS, H] f32
    cosd = cos_ref[...]                                      # [BS, DH] f32
    sind = sin_ref[...]                                      # [BS, DH] f32
    bias = bias_scr[...]                                     # [B, S, S] f32

    # --- input RMSNorm (f32) ---------------------------------------------------------
    var = jnp.mean(x * x, axis=-1, keepdims=True)
    xn = x * jax.lax.rsqrt(var + RMS_EPS) * ln1_ref[0]

    # --- fused QKV projection: [Wq*scale | Wk | Wv]  (bf16 MXU, f32 accumulate) -------
    proj = jnp.dot(xn.astype(jnp.bfloat16), wqkv_ref[0],
                   preferred_element_type=jnp.float32)       # [BS, 3H]
    q = proj[:, 0 * H:1 * H]
    k = proj[:, 1 * H:2 * H]
    v = proj[:, 2 * H:3 * H]

    # --- rotate_half via one tiny MXU matmul against resident block-diag R ------------
    r = rot_ref[...]                                         # [H, H] bf16 (exact ±1)
    q_rot = jnp.dot(q.astype(jnp.bfloat16), r, preferred_element_type=jnp.float32)
    k_rot = jnp.dot(k.astype(jnp.bfloat16), r, preferred_element_type=jnp.float32)

    # --- causal attention, batched over B per head (no per-batch loop) ----------------
    ctx_heads = []
    for hh in range(N_HEADS):
        sl = slice(hh * DH, (hh + 1) * DH)
        # RoPE per head against the un-tiled cos/sin (identical across heads)
        qh = (q[:, sl] * cosd + q_rot[:, sl] * sind).reshape(B, S, DH)
        kh = (k[:, sl] * cosd + k_rot[:, sl] * sind).reshape(B, S, DH)
        vh = v[:, sl].reshape(B, S, DH)
        s = jnp.einsum('bqd,bkd->bqk',
                       qh.astype(jnp.bfloat16), kh.astype(jnp.bfloat16),
                       preferred_element_type=jnp.float32)   # [B, S, S]
        s = s + bias                                         # scale folded into Wq
        m = jnp.max(s, axis=-1, keepdims=True)
        e = jnp.exp(s - m)
        denom = jnp.maximum(jnp.sum(e, axis=-1, keepdims=True), jnp.float32(1e-30))
        p = e * pl.reciprocal(denom, approx=True)
        ctx = jnp.einsum('bqk,bkd->bqd',
                         p.astype(jnp.bfloat16), vh.astype(jnp.bfloat16),
                         preferred_element_type=jnp.float32)  # [B, S, DH]
        ctx_heads.append(ctx.reshape(BS, DH))
    ctx = jnp.concatenate(ctx_heads, axis=-1)                # [BS, H]

    attn_out = jnp.dot(ctx.astype(jnp.bfloat16), wo_ref[0],
                       preferred_element_type=jnp.float32)
    hres = x + attn_out

    # --- post-attention RMSNorm + fused SiLU MLP --------------------------------------
    var2 = jnp.mean(hres * hres, axis=-1, keepdims=True)
    hn = hres * jax.lax.rsqrt(var2 + RMS_EPS) * ln2_ref[0]
    gu = jnp.dot(hn.astype(jnp.bfloat16), wgu_ref[0],
                 preferred_element_type=jnp.float32)         # [BS, 2I]
    g = gu[:, :INTERMEDIATE]
    u = gu[:, INTERMEDIATE:]
    act = (g * jax.nn.sigmoid(g)) * u
    mlp = jnp.dot(act.astype(jnp.bfloat16), wd_ref[0],
                  preferred_element_type=jnp.float32)

    h_new = hres + mlp
    h_scr[...] = h_new

    # --- final LayerNorm epilogue, fused into the last layer step ---------------------
    @pl.when(l == pl.num_programs(0) - 1)
    def _final():
        mean = jnp.mean(h_new, axis=-1, keepdims=True)
        var3 = jnp.mean((h_new - mean) * (h_new - mean), axis=-1, keepdims=True)
        o_ref[...] = ((h_new - mean) * jax.lax.rsqrt(var3 + LN_EPS)
                      * lnf_w_ref[...] + lnf_b_ref[...])


# ----------------------------- pallas_call wrapper ---------------------------------------
def run_model_kernels(x_flat, cos_flat, sin_flat, key_mask, w, r_mat, lnf_w, lnf_b):
    BS, H = x_flat.shape
    B, _, S = key_mask.shape
    L = w["wqkv"].shape[0]

    const2 = lambda l: (0, 0)           # layer-invariant, stays resident
    const3 = lambda l: (0, 0, 0)
    layer3 = lambda l: (l, 0, 0)        # per-layer weight stream

    in_specs = [
        pl.BlockSpec((BS, H), const2),                           # hidden_states (embeds)
        pl.BlockSpec((BS, HEAD_DIM), const2),                    # cos (un-tiled, per head)
        pl.BlockSpec((BS, HEAD_DIM), const2),                    # sin
        pl.BlockSpec((B, 1, S), const3),                         # key padding mask
        pl.BlockSpec((H, H), const2),                            # rotate_half matrix R
        pl.BlockSpec((1, 1, H), layer3),                         # input RMSNorm weight
        pl.BlockSpec((1, H, 3 * H), layer3),                     # [Wq*scale | Wk | Wv]
        pl.BlockSpec((1, H, H), layer3),                         # Wo
        pl.BlockSpec((1, 1, H), layer3),                         # post-attn RMSNorm weight
        pl.BlockSpec((1, H, 2 * INTERMEDIATE), layer3),          # [Wgate | Wup]
        pl.BlockSpec((1, INTERMEDIATE, H), layer3),              # Wdown
        pl.BlockSpec((1, H), const2),                            # final LN weight
        pl.BlockSpec((1, H), const2),                            # final LN bias
    ]
    out_spec = pl.BlockSpec((BS, H), const2)

    # NOTE: at realistic H / INTERMEDIATE the weight blocks must be K/N-tiled with an
    # extra grid axis + pl.Buffered, and vmem_limit_bytes raised per target (v5e/v6e:
    # 128 MiB physical; v7x: 64 MiB).  At this toy size everything fits with headroom.
    return pl.pallas_call(
        fused_decoder_kernel,
        out_shape=jax.ShapeDtypeStruct((BS, H), jnp.float32),
        grid=(L,),
        in_specs=in_specs,
        out_specs=out_spec,
        scratch_shapes=[
            pltpu.VMEM((BS, H), jnp.float32),                    # resident hidden_states
            pltpu.VMEM((B, S, S), jnp.float32),                  # resident attention bias
        ],
        compiler_params=pltpu.CompilerParams(
            dimension_semantics=("arbitrary",),
        ),
    )(x_flat, cos_flat, sin_flat, key_mask, r_mat,
      w["ln1"], w["wqkv"], w["wo"], w["ln2"], w["wgu"], w["wd"], lnf_w, lnf_b)


# ----------------------------- DecoderOnlyModel.forward ----------------------------------
def decoder_only_model_forward(params, input_ids, attention_mask, cache_position,
                               position_ids=None):
    B, S = input_ids.shape

    # embedding + hidden_multiplier (folded away when it is 1)
    hidden_states = jnp.take(params["embed"], input_ids, axis=0)        # [B, S, H]
    if HIDDEN_MULTIPLIER != 1.0:
        hidden_states = hidden_states * HIDDEN_MULTIPLIER

    position_ids = cache_position if position_ids is None else position_ids

    # rotary_emb(...) -> slice_and_unsqueeze_cos_sin (vectorized), kept at HEAD_DIM width
    cos, sin = slice_cos_sin(params["cos_tab"], params["sin_tab"], position_ids)  # [B,S,Dh]

    # attn_impl == 'eager' (partition_len is None) -> seq_positions = cache_position[:, :1]
    seq_positions = cache_position[:, :1]                                # noqa: F841
    # TODO(synk): past_key_values paging / block_tables / flash-attn partitioned
    # seq_positions / sliding-window layers are runtime KV-cache machinery; this
    # prefill kernel attends only over the current sequence.

    key_mask = attention_mask.astype(jnp.float32)[:, None, :]            # [B, 1, S]

    x_flat = hidden_states.reshape(B * S, HIDDEN)
    cos_flat = cos.reshape(B * S, HEAD_DIM)
    sin_flat = sin.reshape(B * S, HEAD_DIM)

    out_flat = run_model_kernels(x_flat, cos_flat, sin_flat, key_mask,
                                 params["layers"], params["rot"],
                                 params["ln_f_w"], params["ln_f_b"])
    return out_flat.reshape(B, S, HIDDEN)


# ----------------------------- deterministic parameter init ------------------------------
def init_params(key):
    keys = jax.random.split(key, 2 + N_LAYERS)
    embed = jax.random.normal(keys[0], (VOCAB, HIDDEN), jnp.float32) * 0.02
    cos_tab, sin_tab = make_rotary_tables(MAX_SEQ_LEN, HEAD_DIM)
    scale = 1.0 / math.sqrt(HEAD_DIM)                                    # folded into Wq

    ln1, ln2, wqkv, wo, wgu, wd = [], [], [], [], [], []
    for li in range(N_LAYERS):
        lk = jax.random.split(keys[2 + li], 7)
        wq = jax.random.normal(lk[0], (HIDDEN, HIDDEN), jnp.float32) * 0.02
        wk = jax.random.normal(lk[1], (HIDDEN, HIDDEN), jnp.float32) * 0.02
        wv = jax.random.normal(lk[2], (HIDDEN, HIDDEN), jnp.float32) * 0.02
        wo_l = jax.random.normal(lk[3], (HIDDEN, HIDDEN), jnp.float32) * 0.02
        wg = jax.random.normal(lk[4], (HIDDEN, INTERMEDIATE), jnp.float32) * 0.02
        wu = jax.random.normal(lk[5], (HIDDEN, INTERMEDIATE), jnp.float32) * 0.02
        wd_l = jax.random.normal(lk[6], (INTERMEDIATE, HIDDEN), jnp.float32) * 0.02
        ln1.append(jnp.ones((1, HIDDEN), jnp.float32))
        ln2.append(jnp.ones((1, HIDDEN), jnp.float32))
        # fused QKV with 1/sqrt(Dh) folded into Wq (rotate_half NOT folded -> [H, 3H])
        wqkv.append(jnp.concatenate([wq * scale, wk, wv], axis=1))
        wo.append(wo_l)
        wgu.append(jnp.concatenate([wg, wu], axis=1))
        wd.append(wd_l)

    layers = dict(
        ln1=jnp.stack(ln1),                                   # [L, 1, H]  f32
        ln2=jnp.stack(ln2),                                   # [L, 1, H]  f32
        wqkv=jnp.stack(wqkv).astype(jnp.bfloat16),            # [L, H, 3H] bf16
        wo=jnp.stack(wo).astype(jnp.bfloat16),                # [L, H, H]  bf16
        wgu=jnp.stack(wgu).astype(jnp.bfloat16),              # [L, H, 2I] bf16
        wd=jnp.stack(wd).astype(jnp.bfloat16),                # [L, I, H]  bf16
    )
    return dict(
        embed=embed,
        cos_tab=cos_tab,
        sin_tab=sin_tab,
        rot=rotate_half_matrix().astype(jnp.bfloat16),        # [H, H] ±1 (exact in bf16)
        layers=layers,
        ln_f_w=jnp.ones((1, HIDDEN), jnp.float32),
        ln_f_b=jnp.zeros((1, HIDDEN), jnp.float32),
    )


# ----------------------------- main -------------------------------------------------------
if __name__ == "__main__":
    key = jax.random.PRNGKey(0)
    params = init_params(key)

    B, S = 2, 8
    input_ids = jax.random.randint(jax.random.PRNGKey(1), (B, S), 0, VOCAB, jnp.int32)
    attention_mask = jnp.ones((B, S), jnp.int32)
    cache_position = jnp.broadcast_to(jnp.arange(S, dtype=jnp.int32)[None, :], (B, S))

    out = decoder_only_model_forward(params, input_ids, attention_mask, cache_position)
    out = jax.block_until_ready(out)
    assert out.shape == (B, S, HIDDEN) and out.dtype == jnp.float32
    assert bool(jnp.all(jnp.isfinite(out)))
    print("KERNEL_OK")
</pallas_src>

<mosaic_0001>
module attributes {stable_mosaic.version = 11 : i64} {
  func.func @fused_decoder_kernel(%arg0: i32, %arg1: memref<16x64xf32, #tpu.memory_space<vmem>>, %arg2: memref<16x32xf32, #tpu.memory_space<vmem>>, %arg3: memref<16x32xf32, #tpu.memory_space<vmem>>, %arg4: memref<2x1x8xf32, #tpu.memory_space<vmem>>, %arg5: memref<64x64xbf16, #tpu.memory_space<vmem>>, %arg6: memref<1x1x64xf32, #tpu.memory_space<vmem>>, %arg7: memref<1x64x192xbf16, #tpu.memory_space<vmem>>, %arg8: memref<1x64x64xbf16, #tpu.memory_space<vmem>>, %arg9: memref<1x1x64xf32, #tpu.memory_space<vmem>>, %arg10: memref<1x64x256xbf16, #tpu.memory_space<vmem>>, %arg11: memref<1x128x64xbf16, #tpu.memory_space<vmem>>, %arg12: memref<1x64xf32, #tpu.memory_space<vmem>>, %arg13: memref<1x64xf32, #tpu.memory_space<vmem>>, %arg14: memref<16x64xf32, #tpu.memory_space<vmem>>, %arg15: memref<16x64xf32, #tpu.memory_space<vmem>>, %arg16: memref<2x8x8xf32, #tpu.memory_space<vmem>>) attributes {dimension_semantics = [#tpu.dimension_semantics<arbitrary>], iteration_bounds = array<i64: 2>, scalar_prefetch = 0 : i64, scratch_operands = 2 : i64, tpu.core_type = #tpu.core_type<tc>, window_params = [{pipeline_mode = #tpu.pipeline_mode<synchronous>, transform_indices = @transform_0, window_bounds = array<i64: 16, 64>}, {pipeline_mode = #tpu.pipeline_mode<synchronous>, transform_indices = @transform_1, window_bounds = array<i64: 16, 32>}, {pipeline_mode = #tpu.pipeline_mode<synchronous>, transform_indices = @transform_2, window_bounds = array<i64: 16, 32>}, {pipeline_mode = #tpu.pipeline_mode<synchronous>, transform_indices = @transform_3, window_bounds = array<i64: 2, 1, 8>}, {pipeline_mode = #tpu.pipeline_mode<synchronous>, transform_indices = @transform_4, window_bounds = array<i64: 64, 64>}, {transform_indices = @transform_5, window_bounds = array<i64: 1, 1, 64>}, {transform_indices = @transform_6, window_bounds = array<i64: 1, 64, 192>}, {transform_indices = @transform_7, window_bounds = array<i64: 1, 64, 64>}, {transform_indices = @transform_8, window_bounds = array<i64: 1, 1, 64>}, {transform_indices = @transform_9, window_bounds = array<i64: 1, 64, 256>}, {transform_indices = @transform_10, window_bounds = array<i64: 1, 128, 64>}, {pipeline_mode = #tpu.pipeline_mode<synchronous>, transform_indices = @transform_11, window_bounds = array<i64: 1, 64>}, {pipeline_mode = #tpu.pipeline_mode<synchronous>, transform_indices = @transform_12, window_bounds = array<i64: 1, 64>}, {pipeline_mode = #tpu.pipeline_mode<synchronous>, transform_indices = @transform_13, window_bounds = array<i64: 16, 64>}]} {
    %c0_i32 = arith.constant 0 : i32
    %0 = arith.cmpi eq, %arg0, %c0_i32 : i32
    %1 = arith.extui %0 : i1 to i32
    %c0_i32_0 = arith.constant 0 : i32
    %2 = arith.cmpi ne, %1, %c0_i32_0 : i32
    scf.if %2 {
      %c0_54 = arith.constant 0 : index
      %c0_55 = arith.constant 0 : index
      %143 = vector.load %arg1[%c0_54, %c0_55] : memref<16x64xf32, #tpu.memory_space<vmem>>, vector<16x64xf32>
      %c0_56 = arith.constant 0 : index
      %c0_57 = arith.constant 0 : index
      %144 = vector.load %arg15[%c0_56, %c0_57] : memref<16x64xf32, #tpu.memory_space<vmem>>, vector<16x64xf32>
      tpu.vector_store %arg15[%c0_56, %c0_57], %143 {strides = array<i32>} : memref<16x64xf32, #tpu.memory_space<vmem>>, vector<16x64xf32>,
      %145 = tpu.iota {dimensions = array<i32: 1>} : vector<2x8x8xi32>
      %146 = tpu.iota {dimensions = array<i32: 2>} : vector<2x8x8xi32>
      %147 = arith.cmpi sge, %145, %146 : vector<2x8x8xi32>
      %c0_58 = arith.constant 0 : index
      %c0_59 = arith.constant 0 : index
      %c0_60 = arith.constant 0 : index
      %148 = vector.load %arg4[%c0_58, %c0_59, %c0_60] : memref<2x1x8xf32, #tpu.memory_space<vmem>>, vector<2x1x8xf32>
      %cst_61 = arith.constant 5.000000e-01 : f32
      %149 = vector.broadcast %cst_61 : f32 to vector<2x1x8xf32>
      %150 = arith.cmpf ogt, %148, %149 : vector<2x1x8xf32>
      %151 = vector.broadcast %150 : vector<2x1x8xi1> to vector<2x8x8xi1>
      %152 = arith.andi %147, %151 : vector<2x8x8xi1>
      %cst_62 = arith.constant 0.000000e+00 : f32
      %cst_63 = arith.constant -1.000000e+30 : f32
      %153 = vector.broadcast %cst_62 : f32 to vector<2x8x8xf32>
      %154 = vector.broadcast %cst_63 : f32 to vector<2x8x8xf32>
      %155 = arith.select %152, %153, %154 : vector<2x8x8xi1>, vector<2x8x8xf32>
      %c0_64 = arith.constant 0 : index
      %c0_65 = arith.constant 0 : index
      %c0_66 = arith.constant 0 : index
      %156 = vector.load %arg16[%c0_64, %c0_65, %c0_66] : memref<2x8x8xf32, #tpu.memory_space<vmem>>, vector<2x8x8xf32>
      tpu.vector_store %arg16[%c0_64, %c0_65, %c0_66], %155 {strides = array<i32>} : memref<2x8x8xf32, #tpu.memory_space<vmem>>, vector<2x8x8xf32>,
    } else {
    }
    %c0 = arith.constant 0 : index
    %c0_1 = arith.constant 0 : index
    %3 = vector.load %arg15[%c0, %c0_1] : memref<16x64xf32, #tpu.memory_space<vmem>>, vector<16x64xf32>
    %c0_2 = arith.constant 0 : index
    %c0_3 = arith.constant 0 : index
    %4 = vector.load %arg2[%c0_2, %c0_3] : memref<16x32xf32, #tpu.memory_space<vmem>>, vector<16x32xf32>
    %c0_4 = arith.constant 0 : index
    %c0_5 = arith.constant 0 : index
    %5 = vector.load %arg3[%c0_4, %c0_5] : memref<16x32xf32, #tpu.memory_space<vmem>>, vector<16x32xf32>
    %c0_6 = arith.constant 0 : index
    %c0_7 = arith.constant 0 : index
    %c0_8 = arith.constant 0 : index
    %6 = vector.load %arg16[%c0_6, %c0_7, %c0_8] : memref<2x8x8xf32, #tpu.memory_space<vmem>>, vector<2x8x8xf32>
    %7 = arith.mulf %3, %3 : vector<16x64xf32>
    %cst = arith.constant dense<0.000000e+00> : vector<16xf32>
    %8 = vector.multi_reduction <add>, %7, %cst [1] : vector<16x64xf32> to vector<16xf32>
    %9 = vector.shape_cast %8 : vector<16xf32> to vector<16x1xf32>
    %cst_9 = arith.constant 6.400000e+01 : f32
    %10 = vector.broadcast %cst_9 : f32 to vector<16x1xf32>
    %11 = arith.divf %9, %10 : vector<16x1xf32>
    %cst_10 = arith.constant 9.99999997E-7 : f32
    %12 = vector.broadcast %cst_10 : f32 to vector<16x1xf32>
    %13 = arith.addf %11, %12 : vector<16x1xf32>
    %14 = math.rsqrt %13 : vector<16x1xf32>
    %15 = vector.broadcast %14 : vector<16x1xf32> to vector<16x64xf32>
    %16 = arith.mulf %3, %15 : vector<16x64xf32>
    %c0_11 = arith.constant 0 : index
    %c0_12 = arith.constant 0 : index
    %c0_13 = arith.constant 0 : index
    %17 = vector.load %arg6[%c0_11, %c0_12, %c0_13] : memref<1x1x64xf32, #tpu.memory_space<vmem>>, vector<1x1x64xf32>
    %18 = vector.shape_cast %17 : vector<1x1x64xf32> to vector<1x64xf32>
    %19 = vector.broadcast %18 : vector<1x64xf32> to vector<16x64xf32>
    %20 = arith.mulf %16, %19 : vector<16x64xf32>
    %21 = arith.truncf %20 : vector<16x64xf32> to vector<16x64xbf16>
    %c0_14 = arith.constant 0 : index
    %c0_15 = arith.constant 0 : index
    %c0_16 = arith.constant 0 : index
    %22 = vector.load %arg7[%c0_14, %c0_15, %c0_16] : memref<1x64x192xbf16, #tpu.memory_space<vmem>>, vector<1x64x192xbf16>
    %23 = vector.shape_cast %22 : vector<1x64x192xbf16> to vector<64x192xbf16>
    %cst_17 = arith.constant dense<0.000000e+00> : vector<16x192xf32>
    %24 = tpu.matmul %21, %23, %cst_17 {dimension_numbers = #tpu.dot_dimension_numbers<[1], [0], [0], [1], [0, 0, 1, 1], [], []>} : vector<16x64xbf16>, vector<64x192xbf16>, vector<16x192xf32> -> vector<16x192xf32>
    %25 = vector.extract_strided_slice %24 {offsets = [0, 0], sizes = [16, 64], strides = [1, 1]} : vector<16x192xf32> to vector<16x64xf32>
    %26 = vector.extract_strided_slice %24 {offsets = [0, 64], sizes = [16, 64], strides = [1, 1]} : vector<16x192xf32> to vector<16x64xf32>
    %27 = vector.extract_strided_slice %24 {offsets = [0, 128], sizes = [16, 64], strides = [1, 1]} : vector<16x192xf32> to vector<16x64xf32>
    %c0_18 = arith.constant 0 : index
    %c0_19 = arith.constant 0 : index
    %28 = vector.load %arg5[%c0_18, %c0_19] : memref<64x64xbf16, #tpu.memory_space<vmem>>, vector<64x64xbf16>
    %29 = arith.truncf %25 : vector<16x64xf32> to vector<16x64xbf16>
    %cst_20 = arith.constant dense<0.000000e+00> : vector<16x64xf32>
    %30 = tpu.matmul %29, %28, %cst_20 {dimension_numbers = #tpu.dot_dimension_numbers<[1], [0], [0], [1], [0, 0, 1, 1], [], []>} : vector<16x64xbf16>, vector<64x64xbf16>, vector<16x64xf32> -> vector<16x64xf32>
    %31 = arith.truncf %26 : vector<16x64xf32> to vector<16x64xbf16>
    %cst_21 = arith.constant dense<0.000000e+00> : vector<16x64xf32>
    %32 = tpu.matmul %31, %28, %cst_21 {dimension_numbers = #tpu.dot_dimension_numbers<[1], [0], [0], [1], [0, 0, 1, 1], [], []>} : vector<16x64xbf16>, vector<64x64xbf16>, vector<16x64xf32> -> vector<16x64xf32>
    %33 = vector.extract_strided_slice %25 {offsets = [0, 0], sizes = [16, 32], strides = [1, 1]} : vector<16x64xf32> to vector<16x32xf32>
    %34 = arith.mulf %33, %4 : vector<16x32xf32>
    %35 = vector.extract_strided_slice %30 {offsets = [0, 0], sizes = [16, 32], strides = [1, 1]} : vector<16x64xf32> to vector<16x32xf32>
    %36 = arith.mulf %35, %5 : vector<16x32xf32>
    %37 = arith.addf %34, %36 : vector<16x32xf32>
    %38 = vector.shape_cast %37 : vector<16x32xf32> to vector<2x8x32xf32>
    %39 = vector.extract_strided_slice %26 {offsets = [0, 0], sizes = [16, 32], strides = [1, 1]} : vector<16x64xf32> to vector<16x32xf32>
    %40 = arith.mulf %39, %4 : vector<16x32xf32>
    %41 = vector.extract_strided_slice %32 {offsets = [0, 0], sizes = [16, 32], strides = [1, 1]} : vector<16x64xf32> to vector<16x32xf32>
    %42 = arith.mulf %41, %5 : vector<16x32xf32>
    %43 = arith.addf %40, %42 : vector<16x32xf32>
    %44 = vector.shape_cast %43 : vector<16x32xf32> to vector<2x8x32xf32>
    %45 = vector.extract_strided_slice %27 {offsets = [0, 0], sizes = [16, 32], strides = [1, 1]} : vector<16x64xf32> to vector<16x32xf32>
    %46 = vector.shape_cast %45 : vector<16x32xf32> to vector<2x8x32xf32>
    %47 = arith.truncf %38 : vector<2x8x32xf32> to vector<2x8x32xbf16>
    %48 = arith.truncf %44 : vector<2x8x32xf32> to vector<2x8x32xbf16>
    "tpu.trace_start"() <{level = 10 : i32, message = "bqd,bkd->bqk"}> : () -> ()
    %cst_22 = arith.constant dense<0.000000e+00> : vector<2x8x8xf32>
    %49 = tpu.matmul %47, %48, %cst_22 {dimension_numbers = #tpu.dot_dimension_numbers<[2], [2], [1], [1], [0, 0, 0, 1, 1, 1], [0], [0]>} : vector<2x8x32xbf16>, vector<2x8x32xbf16>, vector<2x8x8xf32> -> vector<2x8x8xf32>
    "tpu.trace_stop"() : () -> ()
    %50 = arith.addf %49, %6 : vector<2x8x8xf32>
    %cst_23 = arith.constant dense<0xFF800000> : vector<2x8xf32>
    %51 = vector.multi_reduction <maximumf>, %50, %cst_23 [2] : vector<2x8x8xf32> to vector<2x8xf32>
    %52 = vector.shape_cast %51 : vector<2x8xf32> to vector<2x8x1xf32>
    %53 = vector.broadcast %52 : vector<2x8x1xf32> to vector<2x8x8xf32>
    %54 = arith.subf %50, %53 : vector<2x8x8xf32>
    %55 = math.exp %54 : vector<2x8x8xf32>
    %cst_24 = arith.constant dense<0.000000e+00> : vector<2x8xf32>
    %56 = vector.multi_reduction <add>, %55, %cst_24 [2] : vector<2x8x8xf32> to vector<2x8xf32>
    %57 = vector.shape_cast %56 : vector<2x8xf32> to vector<2x8x1xf32>
    %cst_25 = arith.constant 1.000000e-30 : f32
    %58 = vector.broadcast %cst_25 : f32 to vector<2x8x1xf32>
    %59 = arith.maximumf %57, %58 : vector<2x8x1xf32>
    %60 = tpu.reciprocal %59 {approx = true} : vector<2x8x1xf32> -> vector<2x8x1xf32>
    %61 = vector.broadcast %60 : vector<2x8x1xf32> to vector<2x8x8xf32>
    %62 = arith.mulf %55, %61 : vector<2x8x8xf32>
    %63 = arith.truncf %62 : vector<2x8x8xf32> to vector<2x8x8xbf16>
    %64 = arith.truncf %46 : vector<2x8x32xf32> to vector<2x8x32xbf16>
    "tpu.trace_start"() <{level = 10 : i32, message = "bqk,bkd->bqd"}> : () -> ()
    %cst_26 = arith.constant dense<0.000000e+00> : vector<2x8x32xf32>
    %65 = tpu.matmul %63, %64, %cst_26 {dimension_numbers = #tpu.dot_dimension_numbers<[2], [1], [1], [2], [0, 0, 0, 1, 1, 2], [0], [0]>} : vector<2x8x8xbf16>, vector<2x8x32xbf16>, vector<2x8x32xf32> -> vector<2x8x32xf32>
    "tpu.trace_stop"() : () -> ()
    %66 = vector.shape_cast %65 : vector<2x8x32xf32> to vector<16x32xf32>
    %67 = vector.extract_strided_slice %25 {offsets = [0, 32], sizes = [16, 32], strides = [1, 1]} : vector<16x64xf32> to vector<16x32xf32>
    %68 = arith.mulf %67, %4 : vector<16x32xf32>
    %69 = vector.extract_strided_slice %30 {offsets = [0, 32], sizes = [16, 32], strides = [1, 1]} : vector<16x64xf32> to vector<16x32xf32>
    %70 = arith.mulf %69, %5 : vector<16x32xf32>
    %71 = arith.addf %68, %70 : vector<16x32xf32>
    %72 = vector.shape_cast %71 : vector<16x32xf32> to vector<2x8x32xf32>
    %73 = vector.extract_strided_slice %26 {offsets = [0, 32], sizes = [16, 32], strides = [1, 1]} : vector<16x64xf32> to vector<16x32xf32>
    %74 = arith.mulf %73, %4 : vector<16x32xf32>
    %75 = vector.extract_strided_slice %32 {offsets = [0, 32], sizes = [16, 32], strides = [1, 1]} : vector<16x64xf32> to vector<16x32xf32>
    %76 = arith.mulf %75, %5 : vector<16x32xf32>
    %77 = arith.addf %74, %76 : vector<16x32xf32>
    %78 = vector.shape_cast %77 : vector<16x32xf32> to vector<2x8x32xf32>
    %79 = vector.extract_strided_slice %27 {offsets = [0, 32], sizes = [16, 32], strides = [1, 1]} : vector<16x64xf32> to vector<16x32xf32>
    %80 = vector.shape_cast %79 : vector<16x32xf32> to vector<2x8x32xf32>
    %81 = arith.truncf %72 : vector<2x8x32xf32> to vector<2x8x32xbf16>
    %82 = arith.truncf %78 : vector<2x8x32xf32> to vector<2x8x32xbf16>
    "tpu.trace_start"() <{level = 10 : i32, message = "bqd,bkd->bqk"}> : () -> ()
    %cst_27 = arith.constant dense<0.000000e+00> : vector<2x8x8xf32>
    %83 = tpu.matmul %81, %82, %cst_27 {dimension_numbers = #tpu.dot_dimension_numbers<[2], [2], [1], [1], [0, 0, 0, 1, 1, 1], [0], [0]>} : vector<2x8x32xbf16>, vector<2x8x32xbf16>, vector<2x8x8xf32> -> vector<2x8x8xf32>
    "tpu.trace_stop"() : () -> ()
    %84 = arith.addf %83, %6 : vector<2x8x8xf32>
    %cst_28 = arith.constant dense<0xFF800000> : vector<2x8xf32>
    %85 = vector.multi_reduction <maximumf>, %84, %cst_28 [2] : vector<2x8x8xf32> to vector<2x8xf32>
    %86 = vector.shape_cast %85 : vector<2x8xf32> to vector<2x8x1xf32>
    %87 = vector.broadcast %86 : vector<2x8x1xf32> to vector<2x8x8xf32>
    %88 = arith.subf %84, %87 : vector<2x8x8xf32>
    %89 = math.exp %88 : vector<2x8x8xf32>
    %cst_29 = arith.constant dense<0.000000e+00> : vector<2x8xf32>
    %90 = vector.multi_reduction <add>, %89, %cst_29 [2] : vector<2x8x8xf32> to vector<2x8xf32>
    %91 = vector.shape_cast %90 : vector<2x8xf32> to vector<2x8x1xf32>
    %cst_30 = arith.constant 1.000000e-30 : f32
    %92 = vector.broadcast %cst_30 : f32 to vector<2x8x1xf32>
    %93 = arith.maximumf %91, %92 : vector<2x8x1xf32>
    %94 = tpu.reciprocal %93 {approx = true} : vector<2x8x1xf32> -> vector<2x8x1xf32>
    %95 = vector.broadcast %94 : vector<2x8x1xf32> to vector<2x8x8xf32>
    %96 = arith.mulf %89, %95 : vector<2x8x8xf32>
    %97 = arith.truncf %96 : vector<2x8x8xf32> to vector<2x8x8xbf16>
    %98 = arith.truncf %80 : vector<2x8x32xf32> to vector<2x8x32xbf16>
    "tpu.trace_start"() <{level = 10 : i32, message = "bqk,bkd->bqd"}> : () -> ()
    %cst_31 = arith.constant dense<0.000000e+00> : vector<2x8x32xf32>
    %99 = tpu.matmul %97, %98, %cst_31 {dimension_numbers = #tpu.dot_dimension_numbers<[2], [1], [1], [2], [0, 0, 0, 1, 1, 2], [0], [0]>} : vector<2x8x8xbf16>, vector<2x8x32xbf16>, vector<2x8x32xf32> -> vector<2x8x32xf32>
    "tpu.trace_stop"() : () -> ()
    %100 = vector.shape_cast %99 : vector<2x8x32xf32> to vector<16x32xf32>
    %101 = tpu.concatenate %66, %100 in 1 : vector<16x32xf32>, vector<16x32xf32> -> vector<16x64xf32>
    %102 = arith.truncf %101 : vector<16x64xf32> to vector<16x64xbf16>
    %c0_32 = arith.constant 0 : index
    %c0_33 = arith.constant 0 : index
    %c0_34 = arith.constant 0 : index
    %103 = vector.load %arg8[%c0_32, %c0_33, %c0_34] : memref<1x64x64xbf16, #tpu.memory_space<vmem>>, vector<1x64x64xbf16>
    %104 = vector.shape_cast %103 : vector<1x64x64xbf16> to vector<64x64xbf16>
    %cst_35 = arith.constant dense<0.000000e+00> : vector<16x64xf32>
    %105 = tpu.matmul %102, %104, %cst_35 {dimension_numbers = #tpu.dot_dimension_numbers<[1], [0], [0], [1], [0, 0, 1, 1], [], []>} : vector<16x64xbf16>, vector<64x64xbf16>, vector<16x64xf32> -> vector<16x64xf32>
    %106 = arith.addf %3, %105 : vector<16x64xf32>
    %107 = arith.mulf %106, %106 : vector<16x64xf32>
    %cst_36 = arith.constant dense<0.000000e+00> : vector<16xf32>
    %108 = vector.multi_reduction <add>, %107, %cst_36 [1] : vector<16x64xf32> to vector<16xf32>
    %109 = vector.shape_cast %108 : vector<16xf32> to vector<16x1xf32>
    %cst_37 = arith.constant 6.400000e+01 : f32
    %110 = vector.broadcast %cst_37 : f32 to vector<16x1xf32>
    %111 = arith.divf %109, %110 : vector<16x1xf32>
    %cst_38 = arith.constant 9.99999997E-7 : f32
    %112 = vector.broadcast %cst_38 : f32 to vector<16x1xf32>
    %113 = arith.addf %111, %112 : vector<16x1xf32>
    %114 = math.rsqrt %113 : vector<16x1xf32>
    %115 = vector.broadcast %114 : vector<16x1xf32> to vector<16x64xf32>
    %116 = arith.mulf %106, %115 : vector<16x64xf32>
    %c0_39 = arith.constant 0 : index
    %c0_40 = arith.constant 0 : index
    %c0_41 = arith.constant 0 : index
    %117 = vector.load %arg9[%c0_39, %c0_40, %c0_41] : memref<1x1x64xf32, #tpu.memory_space<vmem>>, vector<1x1x64xf32>
    %118 = vector.shape_cast %117 : vector<1x1x64xf32> to vector<1x64xf32>
    %119 = vector.broadcast %118 : vector<1x64xf32> to vector<16x64xf32>
    %120 = arith.mulf %116, %119 : vector<16x64xf32>
    %121 = arith.truncf %120 : vector<16x64xf32> to vector<16x64xbf16>
    %c0_42 = arith.constant 0 : index
    %c0_43 = arith.constant 0 : index
    %c0_44 = arith.constant 0 : index
    %122 = vector.load %arg10[%c0_42, %c0_43, %c0_44] : memref<1x64x256xbf16, #tpu.memory_space<vmem>>, vector<1x64x256xbf16>
    %123 = vector.shape_cast %122 : vector<1x64x256xbf16> to vector<64x256xbf16>
    %cst_45 = arith.constant dense<0.000000e+00> : vector<16x256xf32>
    %124 = tpu.matmul %121, %123, %cst_45 {dimension_numbers = #tpu.dot_dimension_numbers<[1], [0], [0], [1], [0, 0, 1, 1], [], []>} : vector<16x64xbf16>, vector<64x256xbf16>, vector<16x256xf32> -> vector<16x256xf32>
    %125 = vector.extract_strided_slice %124 {offsets = [0, 0], sizes = [16, 128], strides = [1, 1]} : vector<16x256xf32> to vector<16x128xf32>
    %126 = vector.extract_strided_slice %124 {offsets = [0, 128], sizes = [16, 128], strides = [1, 1]} : vector<16x256xf32> to vector<16x128xf32>
    %127 = arith.negf %125 : vector<16x128xf32>
    %128 = math.exp %127 : vector<16x128xf32>
    %cst_46 = arith.constant 1.000000e+00 : f32
    %129 = vector.broadcast %cst_46 : f32 to vector<16x128xf32>
    %130 = arith.addf %129, %128 : vector<16x128xf32>
    %131 = arith.divf %129, %130 : vector<16x128xf32>
    %132 = arith.mulf %125, %131 : vector<16x128xf32>
    %133 = arith.mulf %132, %126 : vector<16x128xf32>
    %134 = arith.truncf %133 : vector<16x128xf32> to vector<16x128xbf16>
    %c0_47 = arith.constant 0 : index
    %c0_48 = arith.constant 0 : index
    %c0_49 = arith.constant 0 : index
    %135 = vector.load %arg11[%c0_47, %c0_48, %c0_49] : memref<1x128x64xbf16, #tpu.memory_space<vmem>>, vector<1x128x64xbf16>
    %136 = vector.shape_cast %135 : vector<1x128x64xbf16> to vector<128x64xbf16>
    %cst_50 = arith.constant dense<0.000000e+00> : vector<16x64xf32>
    %137 = tpu.matmul %134, %136, %cst_50 {dimension_numbers = #tpu.dot_dimension_numbers<[1], [0], [0], [1], [0, 0, 1, 1], [], []>} : vector<16x128xbf16>, vector<128x64xbf16>, vector<16x64xf32> -> vector<16x64xf32>
    %138 = arith.addf %106, %137 : vector<16x64xf32>
    %c0_51 = arith.constant 0 : index
    %c0_52 = arith.constant 0 : index
    %139 = vector.load %arg15[%c0_51, %c0_52] : memref<16x64xf32, #tpu.memory_space<vmem>>, vector<16x64xf32>
    tpu.vector_store %arg15[%c0_51, %c0_52], %138 {strides = array<i32>} : memref<16x64xf32, #tpu.memory_space<vmem>>, vector<16x64xf32>,
    %c1_i32 = arith.constant 1 : i32
    %140 = arith.cmpi eq, %arg0, %c1_i32 : i32
    %141 = arith.extui %140 : i1 to i32
    %c0_i32_53 = arith.constant 0 : i32
    %142 = arith.cmpi ne, %141, %c0_i32_53 : i32
    scf.if %142 {
      %cst_54 = arith.constant dense<0.000000e+00> : vector<16xf32>
      %143 = vector.multi_reduction <add>, %138, %cst_54 [1] : vector<16x64xf32> to vector<16xf32>
      %144 = vector.shape_cast %143 : vector<16xf32> to vector<16x1xf32>
      %cst_55 = arith.constant 6.400000e+01 : f32
      %145 = vector.broadcast %cst_55 : f32 to vector<16x1xf32>
      %146 = arith.divf %144, %145 : vector<16x1xf32>
      %147 = vector.broadcast %146 : vector<16x1xf32> to vector<16x64xf32>
      %148 = arith.subf %138, %147 : vector<16x64xf32>
      %149 = vector.broadcast %146 : vector<16x1xf32> to vector<16x64xf32>
      %150 = arith.subf %138, %149 : vector<16x64xf32>
      %151 = arith.mulf %148, %150 : vector<16x64xf32>
      %cst_56 = arith.constant dense<0.000000e+00> : vector<16xf32>
      %152 = vector.multi_reduction <add>, %151, %cst_56 [1] : vector<16x64xf32> to vector<16xf32>
      %153 = vector.shape_cast %152 : vector<16xf32> to vector<16x1xf32>
      %cst_57 = arith.constant 6.400000e+01 : f32
      %154 = vector.broadcast %cst_57 : f32 to vector<16x1xf32>
      %155 = arith.divf %153, %154 : vector<16x1xf32>
      %156 = vector.broadcast %146 : vector<16x1xf32> to vector<16x64xf32>
      %157 = arith.subf %138, %156 : vector<16x64xf32>
      %cst_58 = arith.constant 9.99999974E-6 : f32
      %158 = vector.broadcast %cst_58 : f32 to vector<16x1xf32>
      %159 = arith.addf %155, %158 : vector<16x1xf32>
      %160 = math.rsqrt %159 : vector<16x1xf32>
      %161 = vector.broadcast %160 : vector<16x1xf32> to vector<16x64xf32>
      %162 = arith.mulf %157, %161 : vector<16x64xf32>
      %c0_59 = arith.constant 0 : index
      %c0_60 = arith.constant 0 : index
      %163 = vector.load %arg12[%c0_59, %c0_60] : memref<1x64xf32, #tpu.memory_space<vmem>>, vector<1x64xf32>
      %164 = vector.broadcast %163 : vector<1x64xf32> to vector<16x64xf32>
      %165 = arith.mulf %162, %164 : vector<16x64xf32>
      %c0_61 = arith.constant 0 : index
      %c0_62 = arith.constant 0 : index
      %166 = vector.load %arg13[%c0_61, %c0_62] : memref<1x64xf32, #tpu.memory_space<vmem>>, vector<1x64xf32>
      %167 = vector.broadcast %166 : vector<1x64xf32> to vector<16x64xf32>
      %168 = arith.addf %165, %167 : vector<16x64xf32>
      %c0_63 = arith.constant 0 : index
      %c0_64 = arith.constant 0 : index
      %169 = vector.load %arg14[%c0_63, %c0_64] : memref<16x64xf32, #tpu.memory_space<vmem>>, vector<16x64xf32>
      tpu.vector_store %arg14[%c0_63, %c0_64], %168 {strides = array<i32>} : memref<16x64xf32, #tpu.memory_space<vmem>>, vector<16x64xf32>,
    } else {
    }
    return
  }
  func.func @transform_0(%arg0: i32) -> (i32, i32) {
    %c0_i32 = arith.constant 0 : i32
    %c0_i32_0 = arith.constant 0 : i32
    %c0_i32_1 = arith.constant 0 : i32
    return %c0_i32, %c0_i32_0 : i32, i32
  }
  func.func @transform_1(%arg0: i32) -> (i32, i32) {
    %c0_i32 = arith.constant 0 : i32
    %c0_i32_0 = arith.constant 0 : i32
    %c0_i32_1 = arith.constant 0 : i32
    return %c0_i32, %c0_i32_0 : i32, i32
  }
  func.func @transform_2(%arg0: i32) -> (i32, i32) {
    %c0_i32 = arith.constant 0 : i32
    %c0_i32_0 = arith.constant 0 : i32
    %c0_i32_1 = arith.constant 0 : i32
    return %c0_i32, %c0_i32_0 : i32, i32
  }
  func.func @transform_3(%arg0: i32) -> (i32, i32, i32) {
    %c0_i32 = arith.constant 0 : i32
    %c0_i32_0 = arith.constant 0 : i32
    %c0_i32_1 = arith.constant 0 : i32
    %c0_i32_2 = arith.constant 0 : i32
    return %c0_i32, %c0_i32_0, %c0_i32_1 : i32, i32, i32
  }
  func.func @transform_4(%arg0: i32) -> (i32, i32) {
    %c0_i32 = arith.constant 0 : i32
    %c0_i32_0 = arith.constant 0 : i32
    %c0_i32_1 = arith.constant 0 : i32
    return %c0_i32, %c0_i32_0 : i32, i32
  }
  func.func @transform_5(%arg0: i32) -> (i32, i32, i32) {
    %c0_i32 = arith.constant 0 : i32
    %c0_i32_0 = arith.constant 0 : i32
    %c0_i32_1 = arith.constant 0 : i32
    return %arg0, %c0_i32, %c0_i32_0 : i32, i32, i32
  }
  func.func @transform_6(%arg0: i32) -> (i32, i32, i32) {
    %c0_i32 = arith.constant 0 : i32
    %c0_i32_0 = arith.constant 0 : i32
    %c0_i32_1 = arith.constant 0 : i32
    return %arg0, %c0_i32, %c0_i32_0 : i32, i32, i32
  }
  func.func @transform_7(%arg0: i32) -> (i32, i32, i32) {
    %c0_i32 = arith.constant 0 : i32
    %c0_i32_0 = arith.constant 0 : i32
    %c0_i32_1 = arith.constant 0 : i32
    return %arg0, %c0_i32, %c0_i32_0 : i32, i32, i32
  }
  func.func @transform_8(%arg0: i32) -> (i32, i32, i32) {
    %c0_i32 = arith.constant 0 : i32
    %c0_i32_0 = arith.constant 0 : i32
    %c0_i32_1 = arith.constant 0 : i32
    return %arg0, %c0_i32, %c0_i32_0 : i32, i32, i32
  }
  func.func @transform_9(%arg0: i32) -> (i32, i32, i32) {
    %c0_i32 = arith.constant 0 : i32
    %c0_i32_0 = arith.constant 0 : i32
    %c0_i32_1 = arith.constant 0 : i32
    return %arg0, %c0_i32, %c0_i32_0 : i32, i32, i32
  }
  func.func @transform_10(%arg0: i32) -> (i32, i32, i32) {
    %c0_i32 = arith.constant 0 : i32
    %c0_i32_0 = arith.constant 0 : i32
    %c0_i32_1 = arith.constant 0 : i32
    return %arg0, %c0_i32, %c0_i32_0 : i32, i32, i32
  }
  func.func @transform_11(%arg0: i32) -> (i32, i32) {
    %c0_i32 = arith.constant 0 : i32
    %c0_i32_0 = arith.constant 0 : i32
    %c0_i32_1 = arith.constant 0 : i32
    return %c0_i32, %c0_i32_0 : i32, i32
  }
  func.func @transform_12(%arg0: i32) -> (i32, i32) {
    %c0_i32 = arith.constant 0 : i32
    %c0_i32_0 = arith.constant 0 : i32
    %c0_i32_1 = arith.constant 0 : i32
    return %c0_i32, %c0_i32_0 : i32, i32
  }
  func.func @transform_13(%arg0: i32) -> (i32, i32) {
    %c0_i32 = arith.constant 0 : i32
    %c0_i32_0 = arith.constant 0 : i32
    %c0_i32_1 = arith.constant 0 : i32
    return %c0_i32, %c0_i32_0 : i32, i32
  }
}

</mosaic_0001>

<llo_original>
// kernel: tpu_custom_call.1
$region0: #{tpu_custom_call.1}
  #allocation0 [shape = 'u32[]', space=smem, size = 0x4, offset = 0x4, fixed_abs, tag = 'smem constant byte address 0x4 - core index']
  #allocation1 [shape = 'u32[144,128]{1,0:T(1,128)}', space=vmem, size = 0x12000, scoped, tag = 'internal scratch']
  #allocation2 [shape = 'f32[16,64]{1,0:T(8,128)}', space=vmem, size = 0x2000, scoped, tag = 'scratch operand']
  #allocation3 [shape = 'f32[2,8,8]{2,1,0:T(8,128)}', space=vmem, size = 0x2000, scoped, tag = 'scratch operand']
  %s0 = inlined_call_operand.vmem [shape: f32[16,64], index: 0, kind: input, shape index: {}]
  %s1 = inlined_call_operand.hbm [shape: f32[16,32], index: 1, kind: input, shape index: {}]
  %s2 = inlined_call_operand.hbm [shape: f32[16,32], index: 2, kind: input, shape index: {}]
  %s3 = inlined_call_operand.vmem [shape: f32[2,1,8], index: 3, kind: input, shape index: {}]
  %s4 = inlined_call_operand.hbm [shape: bf16[64,64], index: 4, kind: input, shape index: {}]
  %s5 = inlined_call_operand.vmem [shape: f32[2,1,64], index: 5, kind: input, shape index: {}]
  %s6 = inlined_call_operand.vmem [shape: bf16[2,64,192], index: 6, kind: input, shape index: {}]
  %s7 = inlined_call_operand.vmem [shape: bf16[2,64,64], index: 7, kind: input, shape index: {}]
  %s8 = inlined_call_operand.vmem [shape: f32[2,1,64], index: 8, kind: input, shape index: {}]
  %s9 = inlined_call_operand.hbm [shape: bf16[2,64,256], index: 9, kind: input, shape index: {}]
  %s10 = inlined_call_operand.vmem [shape: bf16[2,128,64], index: 10, kind: input, shape index: {}]
  %s11 = inlined_call_operand.vmem [shape: f32[1,64], index: 11, kind: input, shape index: {}]
  %s12 = inlined_call_operand.vmem [shape: f32[1,64], index: 12, kind: input, shape index: {}]
  %s13 = inlined_call_operand.hbm [shape: f32[16,64], index: 13, kind: output, shape index: {}]
  %s14 = sld [smem:[#allocation0]]
  $region109: #{tpu_custom_call.1} parent=0
    _
  %s16 = ssub.s32 1, %s14
  %s17 = scalar_select 0, %s16, %s14
  $region1: #{tpu_custom_call.1} parent=0
    #allocation4 [shape = 'u8[8192]{0}', space=vmem, size = 0x2000, scoped, tag = 'input window, operand 1, single buffered']
    #allocation5 [shape = 's32[2]{0}', space=sflag, size = 0x8, scoped, tag = 'scoped memory for tpu_custom_call.1']
    #allocation6 [shape = 's32[2]{0}', space=sflag, size = 0x8, scoped, tag = 'scoped memory for tpu_custom_call.1']
    #allocation7 [shape = 'u8[8192]{0}', space=vmem, size = 0x2000, scoped, tag = 'input window, operand 2, single buffered']
    #allocation8 [shape = 's32[1]{0}', space=sflag, size = 0x4, scoped, tag = 'scoped memory for tpu_custom_call.1']
    #allocation9 [shape = 'u8[16384]{0}', space=vmem, size = 0x4000, scoped, tag = 'input window, operand 4, single buffered']
    #allocation10 [shape = 'u8[65536]{0}', space=vmem, size = 0x10000, scoped, tag = 'input window, operand 9']
    #allocation11 [shape = 's32[2]{0}', space=sflag, size = 0x8, scoped, tag = 'scoped memory for tpu_custom_call.1']
    #allocation12 [shape = 'u8[8192]{0}', space=vmem, size = 0x2000, scoped, tag = 'output window, operand 0, single buffered']
    %18 = vsyncpa [#allocation5], 0
    %19 = vsyncpa [#allocation8], 0
    %20 = vsyncpa [#allocation11], 0
    %s21 = scalar_lea.sflag [#allocation11], 1
    %22 = vsyncpa %s21, 0
    %23 = vsyncpa [#allocation6], 0
    loop: start=0, step=1, limit=4
    $region2: #{tpu_custom_call.1} parent=1 // loop_pre_header
      _
    $region3: #{tpu_custom_call.1} parent=1 // loop_header
      %s25 = sphi 0, %s29
      %p26 = scmp.ge.s32.totalorder %s25, 4
      %s33 = sphi 0, %s33
      %s35 = sphi 0, %s33
      %s36 = sphi 0, %s35
      %s50 = sphi 0, %s36
      %s54 = sphi 0, %s54
      %s56 = sphi 0, %s54
      %s57 = sphi 0, %s56
      %s71 = sphi 0, %s57
      %s75 = sphi 0, %s75
      %s77 = sphi 0, %s75
      %s78 = sphi 0, %s77
      %s92 = sphi 0, %s78
      %s96 = sphi 0, %s96
      %s98 = sphi 0, %s96
      %s99 = sphi 0, %s98
      %s113 = sphi 0, %s99
      %s117 = sphi 0, %s117
      %s119 = sphi 0, %s117
      %s120 = sphi 0, %s119
      %s134 = sphi 0, %s120
      %s140 = sphi 0, %s142
      %s143 = sphi 0, %s140
      %s144 = sphi 0, %s143
      %s160 = sphi 0, %s144
      %s166 = sphi 0, %s168
      %s169 = sphi 0, %s166
      %s170 = sphi 0, %s169
      %s186 = sphi 0, %s170
      %s192 = sphi 0, %s194
      %s195 = sphi 0, %s192
      %s196 = sphi 0, %s195
      %s212 = sphi 0, %s196
      %s218 = sphi 0, %s220
      %s221 = sphi 0, %s218
      %s222 = sphi 0, %s221
      %s238 = sphi 0, %s222
      %s244 = sphi 0, %s246
      %s247 = sphi 0, %s244
      %s248 = sphi 0, %s247
      %s264 = sphi 0, %s248
      %s270 = sphi 0, %s272
      %s273 = sphi 0, %s270
      %s274 = sphi 0, %s273
      %s290 = sphi 0, %s274
      %s294 = sphi 0, %s294
      %s296 = sphi 0, %s294
      %s297 = sphi 0, %s296
      %s311 = sphi 0, %s297
      %s315 = sphi 0, %s315
      %s317 = sphi 0, %s315
      %s318 = sphi 0, %s317
      %s332 = sphi 0, %s318
      %s336 = sphi 0, %s336
      %s338 = sphi 0, %s336
      %s339 = sphi 0, %s338
      %s353 = sphi 0, %s339
    $region4: #{tpu_custom_call.1} parent=1 // loop_header_branch
      %28 = sbr.rel (%p26) target = $region8
    $region5: #{tpu_custom_call.1} parent=1 // loop_body
      %s30 = ssub.s32 %s25, 1
      %s31 = ssub.s32 %s25, 2
      %s32 = sadd.s32 %s25, 1
      %s34 = sadd.s32 %s33, 1
      %p37 = scmp.eq.s32.totalorder %s25, 1
      %p38 = scmp.ne.s32.totalorder %s33, %s35
      %p39 = scmp.eq.s32.totalorder %s25, 0
      %p40 = por %p38, %p39
      %p41 = scmp.ne.s32.totalorder %s33, %s35
      %p42 = scmp.eq.s32.totalorder %s30, 1
      %p43 = por %p41, %p42
      %p44 = scmp.ne.s32.totalorder %s35, %s36
      %p45 = scmp.eq.s32.totalorder %s30, 0
      %p46 = por %p44, %p45
      %p47 = scmp.ne.s32.totalorder %s35, %s36
      %p48 = scmp.eq.s32.totalorder %s31, 1
      %p49 = por %p47, %p48
      %p51 = scmp.ne.s32.totalorder %s36, %s50
      %p52 = scmp.eq.s32.totalorder %s31, 0
      %p53 = por %p51, %p52
      %s55 = sadd.s32 %s54, 1
      %p58 = scmp.eq.s32.totalorder %s25, 1
      %p59 = scmp.ne.s32.totalorder %s54, %s56
      %p60 = scmp.eq.s32.totalorder %s25, 0
      %p61 = por %p59, %p60
      %p62 = scmp.ne.s32.totalorder %s54, %s56
      %p63 = scmp.eq.s32.totalorder %s30, 1
      %p64 = por %p62, %p63
      %p65 = scmp.ne.s32.totalorder %s56, %s57
      %p66 = scmp.eq.s32.totalorder %s30, 0
      %p67 = por %p65, %p66
      %p68 = scmp.ne.s32.totalorder %s56, %s57
      %p69 = scmp.eq.s32.totalorder %s31, 1
      %p70 = por %p68, %p69
      %p72 = scmp.ne.s32.totalorder %s57, %s71
      %p73 = scmp.eq.s32.totalorder %s31, 0
      %p74 = por %p72, %p73
      %s76 = sadd.s32 %s75, 1
      %p79 = scmp.eq.s32.totalorder %s25, 1
      %p80 = scmp.ne.s32.totalorder %s75, %s77
      %p81 = scmp.eq.s32.totalorder %s25, 0
      %p82 = por %p80, %p81
      %p83 = scmp.ne.s32.totalorder %s75, %s77
      %p84 = scmp.eq.s32.totalorder %s30, 1
      %p85 = por %p83, %p84
      %p86 = scmp.ne.s32.totalorder %s77, %s78
      %p87 = scmp.eq.s32.totalorder %s30, 0
      %p88 = por %p86, %p87
      %p89 = scmp.ne.s32.totalorder %s77, %s78
      %p90 = scmp.eq.s32.totalorder %s31, 1
      %p91 = por %p89, %p90
      %p93 = scmp.ne.s32.totalorder %s78, %s92
      %p94 = scmp.eq.s32.totalorder %s31, 0
      %p95 = por %p93, %p94
      %s97 = sadd.s32 %s96, 1
      %p100 = scmp.eq.s32.totalorder %s25, 1
      %p101 = scmp.ne.s32.totalorder %s96, %s98
      %p102 = scmp.eq.s32.totalorder %s25, 0
      %p103 = por %p101, %p102
      %p104 = scmp.ne.s32.totalorder %s96, %s98
      %p105 = scmp.eq.s32.totalorder %s30, 1
      %p106 = por %p104, %p105
      %p107 = scmp.ne.s32.totalorder %s98, %s99
      %p108 = scmp.eq.s32.totalorder %s30, 0
      %p109 = por %p107, %p108
      %p110 = scmp.ne.s32.totalorder %s98, %s99
      %p111 = scmp.eq.s32.totalorder %s31, 1
      %p112 = por %p110, %p111
      %p114 = scmp.ne.s32.totalorder %s99, %s113
      %p115 = scmp.eq.s32.totalorder %s31, 0
      %p116 = por %p114, %p115
      %s118 = sadd.s32 %s117, 1
      %p121 = scmp.eq.s32.totalorder %s25, 1
      %p122 = scmp.ne.s32.totalorder %s117, %s119
      %p123 = scmp.eq.s32.totalorder %s25, 0
      %p124 = por %p122, %p123
      %p125 = scmp.ne.s32.totalorder %s117, %s119
      %p126 = scmp.eq.s32.totalorder %s30, 1
      %p127 = por %p125, %p126
      %p128 = scmp.ne.s32.totalorder %s119, %s120
      %p129 = scmp.eq.s32.totalorder %s30, 0
      %p130 = por %p128, %p129
      %p131 = scmp.ne.s32.totalorder %s119, %s120
      %p132 = scmp.eq.s32.totalorder %s31, 1
      %p133 = por %p131, %p132
      %p135 = scmp.ne.s32.totalorder %s120, %s134
      %p136 = scmp.eq.s32.totalorder %s31, 0
      %p137 = por %p135, %p136
      %s138 = ssub.s32 %s25, %s32
      %p139 = scmp.eq.s32.totalorder %s138, 0
      %s141 = sadd.s32 %s140, 1
      %s142 = scalar_select %p139, %s140, %s141
      %p145 = pneg %p139
      %p146 = scmp.eq.s32.totalorder %s25, 1
      %p147 = por %p145, %p146
      %p148 = scmp.ne.s32.totalorder %s140, %s143
      %p149 = scmp.eq.s32.totalorder %s25, 0
      %p150 = por %p148, %p149
      %p151 = scmp.ne.s32.totalorder %s140, %s143
      %p152 = scmp.eq.s32.totalorder %s30, 1
      %p153 = por %p151, %p152
      %p154 = scmp.ne.s32.totalorder %s143, %s144
      %p155 = scmp.eq.s32.totalorder %s30, 0
      %p156 = por %p154, %p155
      %p157 = scmp.ne.s32.totalorder %s143, %s144
      %p158 = scmp.eq.s32.totalorder %s31, 1
      %p159 = por %p157, %p158
      %p161 = scmp.ne.s32.totalorder %s144, %s160
      %p162 = scmp.eq.s32.totalorder %s31, 0
      %p163 = por %p161, %p162
      %s164 = ssub.s32 %s25, %s32
      %p165 = scmp.eq.s32.totalorder %s164, 0
      %s167 = sadd.s32 %s166, 1
      %s168 = scalar_select %p165, %s166, %s167
      %p171 = pneg %p165
      %p172 = scmp.eq.s32.totalorder %s25, 1
      %p173 = por %p171, %p172
      %p174 = scmp.ne.s32.totalorder %s166, %s169
      %p175 = scmp.eq.s32.totalorder %s25, 0
      %p176 = por %p174, %p175
      %p177 = scmp.ne.s32.totalorder %s166, %s169
      %p178 = scmp.eq.s32.totalorder %s30, 1
      %p179 = por %p177, %p178
      %p180 = scmp.ne.s32.totalorder %s169, %s170
      %p181 = scmp.eq.s32.totalorder %s30, 0
      %p182 = por %p180, %p181
      %p183 = scmp.ne.s32.totalorder %s169, %s170
      %p184 = scmp.eq.s32.totalorder %s31, 1
      %p185 = por %p183, %p184
      %p187 = scmp.ne.s32.totalorder %s170, %s186
      %p188 = scmp.eq.s32.totalorder %s31, 0
      %p189 = por %p187, %p188
      %s190 = ssub.s32 %s25, %s32
      %p191 = scmp.eq.s32.totalorder %s190, 0
      %s193 = sadd.s32 %s192, 1
      %s194 = scalar_select %p191, %s192, %s193
      %p197 = pneg %p191
      %p198 = scmp.eq.s32.totalorder %s25, 1
      %p199 = por %p197, %p198
      %p200 = scmp.ne.s32.totalorder %s192, %s195
      %p201 = scmp.eq.s32.totalorder %s25, 0
      %p202 = por %p200, %p201
      %p203 = scmp.ne.s32.totalorder %s192, %s195
      %p204 = scmp.eq.s32.totalorder %s30, 1
      %p205 = por %p203, %p204
      %p206 = scmp.ne.s32.totalorder %s195, %s196
      %p207 = scmp.eq.s32.totalorder %s30, 0
      %p208 = por %p206, %p207
      %p209 = scmp.ne.s32.totalorder %s195, %s196
      %p210 = scmp.eq.s32.totalorder %s31, 1
      %p211 = por %p209, %p210
      %p213 = scmp.ne.s32.totalorder %s196, %s212
      %p214 = scmp.eq.s32.totalorder %s31, 0
      %p215 = por %p213, %p214
      %s216 = ssub.s32 %s25, %s32
      %p217 = scmp.eq.s32.totalorder %s216, 0
      %s219 = sadd.s32 %s218, 1
      %s220 = scalar_select %p217, %s218, %s219
      %p223 = pneg %p217
      %p224 = scmp.eq.s32.totalorder %s25, 1
      %p225 = por %p223, %p224
      %p226 = scmp.ne.s32.totalorder %s218, %s221
      %p227 = scmp.eq.s32.totalorder %s25, 0
      %p228 = por %p226, %p227
      %p229 = scmp.ne.s32.totalorder %s218, %s221
      %p230 = scmp.eq.s32.totalorder %s30, 1
      %p231 = por %p229, %p230
      %p232 = scmp.ne.s32.totalorder %s221, %s222
      %p233 = scmp.eq.s32.totalorder %s30, 0
      %p234 = por %p232, %p233
      %p235 = scmp.ne.s32.totalorder %s221, %s222
      %p236 = scmp.eq.s32.totalorder %s31, 1
      %p237 = por %p235, %p236
      %p239 = scmp.ne.s32.totalorder %s222, %s238
      %p240 = scmp.eq.s32.totalorder %s31, 0
      %p241 = por %p239, %p240
      %s242 = ssub.s32 %s25, %s32
      %p243 = scmp.eq.s32.totalorder %s242, 0
      %s245 = sadd.s32 %s244, 1
      %s246 = scalar_select %p243, %s244, %s245
      %p249 = pneg %p243
      %p250 = scmp.eq.s32.totalorder %s25, 1
      %p251 = por %p249, %p250
      %p252 = scmp.ne.s32.totalorder %s244, %s247
      %p253 = scmp.eq.s32.totalorder %s25, 0
      %p254 = por %p252, %p253
      %p255 = scmp.ne.s32.totalorder %s244, %s247
      %p256 = scmp.eq.s32.totalorder %s30, 1
      %p257 = por %p255, %p256
      %p258 = scmp.ne.s32.totalorder %s247, %s248
      %p259 = scmp.eq.s32.totalorder %s30, 0
      %p260 = por %p258, %p259
      %p261 = scmp.ne.s32.totalorder %s247, %s248
      %p262 = scmp.eq.s32.totalorder %s31, 1
      %p263 = por %p261, %p262
      %p265 = scmp.ne.s32.totalorder %s248, %s264
      %p266 = scmp.eq.s32.totalorder %s31, 0
      %p267 = por %p265, %p266
      %s268 = ssub.s32 %s25, %s32
      %p269 = scmp.eq.s32.totalorder %s268, 0
      %s271 = sadd.s32 %s270, 1
      %s272 = scalar_select %p269, %s270, %s271
      %p275 = pneg %p269
      %p276 = scmp.eq.s32.totalorder %s25, 1
      %p277 = por %p275, %p276
      %p278 = scmp.ne.s32.totalorder %s270, %s273
      %p279 = scmp.eq.s32.totalorder %s25, 0
      %p280 = por %p278, %p279
      %p281 = scmp.ne.s32.totalorder %s270, %s273
      %p282 = scmp.eq.s32.totalorder %s30, 1
      %p283 = por %p281, %p282
      %p284 = scmp.ne.s32.totalorder %s273, %s274
      %p285 = scmp.eq.s32.totalorder %s30, 0
      %p286 = por %p284, %p285
      %p287 = scmp.ne.s32.totalorder %s273, %s274
      %p288 = scmp.eq.s32.totalorder %s31, 1
      %p289 = por %p287, %p288
      %p291 = scmp.ne.s32.totalorder %s274, %s290
      %p292 = scmp.eq.s32.totalorder %s31, 0
      %p293 = por %p291, %p292
      %s295 = sadd.s32 %s294, 1
      %p298 = scmp.eq.s32.totalorder %s25, 1
      %p299 = scmp.ne.s32.totalorder %s294, %s296
      %p300 = scmp.eq.s32.totalorder %s25, 0
      %p301 = por %p299, %p300
      %p302 = scmp.ne.s32.totalorder %s294, %s296
      %p303 = scmp.eq.s32.totalorder %s30, 1
      %p304 = por %p302, %p303
      %p305 = scmp.ne.s32.totalorder %s296, %s297
      %p306 = scmp.eq.s32.totalorder %s30, 0
      %p307 = por %p305, %p306
      %p308 = scmp.ne.s32.totalorder %s296, %s297
      %p309 = scmp.eq.s32.totalorder %s31, 1
      %p310 = por %p308, %p309
      %p312 = scmp.ne.s32.totalorder %s297, %s311
      %p313 = scmp.eq.s32.totalorder %s31, 0
      %p314 = por %p312, %p313
      %s316 = sadd.s32 %s315, 1
      %p319 = scmp.eq.s32.totalorder %s25, 1
      %p320 = scmp.ne.s32.totalorder %s315, %s317
      %p321 = scmp.eq.s32.totalorder %s25, 0
      %p322 = por %p320, %p321
      %p323 = scmp.ne.s32.totalorder %s315, %s317
      %p324 = scmp.eq.s32.totalorder %s30, 1
      %p325 = por %p323, %p324
      %p326 = scmp.ne.s32.totalorder %s317, %s318
      %p327 = scmp.eq.s32.totalorder %s30, 0
      %p328 = por %p326, %p327
      %p329 = scmp.ne.s32.totalorder %s317, %s318
      %p330 = scmp.eq.s32.totalorder %s31, 1
      %p331 = por %p329, %p330
      %p333 = scmp.ne.s32.totalorder %s318, %s332
      %p334 = scmp.eq.s32.totalorder %s31, 0
      %p335 = por %p333, %p334
      %s337 = sadd.s32 %s336, 1
      %p340 = scmp.eq.s32.totalorder %s25, 1
      %p341 = scmp.ne.s32.totalorder %s336, %s338
      %p342 = scmp.eq.s32.totalorder %s25, 0
      %p343 = por %p341, %p342
      %p344 = scmp.ne.s32.totalorder %s336, %s338
      %p345 = scmp.eq.s32.totalorder %s30, 1
      %p346 = por %p344, %p345
      %p347 = scmp.ne.s32.totalorder %s338, %s339
      %p348 = scmp.eq.s32.totalorder %s30, 0
      %p349 = por %p347, %p348
      %p350 = scmp.ne.s32.totalorder %s338, %s339
      %p351 = scmp.eq.s32.totalorder %s31, 1
      %p352 = por %p350, %p351
      %p354 = scmp.ne.s32.totalorder %s339, %s353
      %p355 = scmp.eq.s32.totalorder %s31, 0
      %p356 = por %p354, %p355
      %p357 = scmp.le.s32.totalorder 1, %s25
      %p358 = scmp.lt.s32.totalorder %s25, 3
      %p359 = pnand %p357, %p358
      %p360 = pneg %p359
      // Predicated region
      $region9: #{tpu_custom_call.1} parent=5 // pred_check
        _
      $region10: #{tpu_custom_call.1} parent=5 // pred_check_branch
        %362 = sbr.rel (%p359) target = $region12
      $region11: #{tpu_custom_call.1} parent=5 // pred_region
        %s363 = ssub.s32 %s25, 1
        // Predicated region
        $region13: #{tpu_custom_call.1} parent=11 // pred_check
          %p364 = pneg %p46
        $region14: #{tpu_custom_call.1} parent=11 // pred_check_branch
          %366 = sbr.rel (%p364) target = $region16
        $region15: #{tpu_custom_call.1} parent=11 // pred_region
          _
        $region16: #{tpu_custom_call.1} parent=11 // pred_fallthru
          _
        // Predicated region
        $region17: #{tpu_custom_call.1} parent=11 // pred_check
          %p367 = pneg %p67
        $region18: #{tpu_custom_call.1} parent=11 // pred_check_branch
          %369 = sbr.rel (%p367) target = $region20
        $region19: #{tpu_custom_call.1} parent=11 // pred_region
          %s371 = ssub.s32 256, 256
          %372 = vsyncadd [#allocation5], %s371
          %s373 = sshll.u32 [#allocation4], 4
          %s374 = int_to_ptr.vmem [resolvable:$true] %s373
          %379 = dma.hbm_to_vmem [thread:$0]  %s1, 256, %s374, [#allocation5], 128, 128, 8
        $region20: #{tpu_custom_call.1} parent=11 // pred_fallthru
          _
        // Predicated region
        $region21: #{tpu_custom_call.1} parent=11 // pred_check
          %p380 = pneg %p88
        $region22: #{tpu_custom_call.1} parent=11 // pred_check_branch
          %382 = sbr.rel (%p380) target = $region24
        $region23: #{tpu_custom_call.1} parent=11 // pred_region
          %s384 = ssub.s32 256, 256
          %385 = vsyncadd [#allocation8], %s384
          %s386 = sshll.u32 [#allocation7], 4
          %s387 = int_to_ptr.vmem [resolvable:$true] %s386
          %392 = dma.hbm_to_vmem [thread:$0]  %s2, 256, %s387, [#allocation8], 128, 128, 8
        $region24: #{tpu_custom_call.1} parent=11 // pred_fallthru
          _
        // Predicated region
        $region25: #{tpu_custom_call.1} parent=11 // pred_check
          %p393 = pneg %p109
        $region26: #{tpu_custom_call.1} parent=11 // pred_check_branch
          %395 = sbr.rel (%p393) target = $region28
        $region27: #{tpu_custom_call.1} parent=11 // pred_region
          _
        $region28: #{tpu_custom_call.1} parent=11 // pred_fallthru
          _
        // Predicated region
        $region29: #{tpu_custom_call.1} parent=11 // pred_check
          %p396 = pneg %p130
        $region30: #{tpu_custom_call.1} parent=11 // pred_check_branch
          %398 = sbr.rel (%p396) target = $region32
        $region31: #{tpu_custom_call.1} parent=11 // pred_region
          %s400 = ssub.s32 512, 512
          %401 = vsyncadd [#allocation8], %s400
          %s402 = sshll.u32 [#allocation9], 4
          %s403 = int_to_ptr.vmem [resolvable:$true] %s402
          %408 = dma.hbm_to_vmem [thread:$0]  %s4, 512, %s403, [#allocation8], 64, 64, 4
        $region32: #{tpu_custom_call.1} parent=11 // pred_fallthru
          _
        // Predicated region
        $region33: #{tpu_custom_call.1} parent=11 // pred_check
          %p409 = pneg %p307
        $region34: #{tpu_custom_call.1} parent=11 // pred_check_branch
          %411 = sbr.rel (%p409) target = $region36
        $region35: #{tpu_custom_call.1} parent=11 // pred_region
          _
        $region36: #{tpu_custom_call.1} parent=11 // pred_fallthru
          _
        // Predicated region
        $region37: #{tpu_custom_call.1} parent=11 // pred_check
          %p412 = pneg %p328
        $region38: #{tpu_custom_call.1} parent=11 // pred_check_branch
          %414 = sbr.rel (%p412) target = $region40
        $region39: #{tpu_custom_call.1} parent=11 // pred_region
          _
        $region40: #{tpu_custom_call.1} parent=11 // pred_fallthru
          _
      $region12: #{tpu_custom_call.1} parent=5 // pred_fallthru
        _
      %p415 = scmp.lt.s32.totalorder %s25, 2
      // Predicated region
      $region41: #{tpu_custom_call.1} parent=5 // pred_check
        %p416 = pneg %p415
      $region42: #{tpu_custom_call.1} parent=5 // pred_check_branch
        %418 = sbr.rel (%p416) target = $region44
      $region43: #{tpu_custom_call.1} parent=5 // pred_region
        // Predicated region
        $region45: #{tpu_custom_call.1} parent=43 // pred_check
          %p419 = pneg %p150
        $region46: #{tpu_custom_call.1} parent=43 // pred_check_branch
          %421 = sbr.rel (%p419) target = $region48
        $region47: #{tpu_custom_call.1} parent=43 // pred_region
          %p422 = scmp.lt.s32.totalorder %s25, 1
          %s423 = scalar_select %p422, %s25, 1
          %s424 = scalar_lea.vmem %s5, %s423
        $region48: #{tpu_custom_call.1} parent=43 // pred_fallthru
          _
        // Predicated region
        $region49: #{tpu_custom_call.1} parent=43 // pred_check
          %p425 = pneg %p176
        $region50: #{tpu_custom_call.1} parent=43 // pred_check_branch
          %427 = sbr.rel (%p425) target = $region52
        $region51: #{tpu_custom_call.1} parent=43 // pred_region
          %p428 = scmp.lt.s32.totalorder %s25, 1
          %s429 = scalar_select %p428, %s25, 1
          %s430 = smul.addr %s429, 16
          %s431 = smul.addr %s430, 4
          %s432 = scalar_lea.vmem %s6, %s431
        $region52: #{tpu_custom_call.1} parent=43 // pred_fallthru
          _
        // Predicated region
        $region53: #{tpu_custom_call.1} parent=43 // pred_check
          %p433 = pneg %p202
        $region54: #{tpu_custom_call.1} parent=43 // pred_check_branch
          %435 = sbr.rel (%p433) target = $region56
        $region55: #{tpu_custom_call.1} parent=43 // pred_region
          %p436 = scmp.lt.s32.totalorder %s25, 1
          %s437 = scalar_select %p436, %s25, 1
          %s438 = smul.addr %s437, 8
          %s439 = smul.addr %s438, 4
          %s440 = scalar_lea.vmem %s7, %s439
        $region56: #{tpu_custom_call.1} parent=43 // pred_fallthru
          _
        // Predicated region
        $region57: #{tpu_custom_call.1} parent=43 // pred_check
          %p441 = pneg %p228
        $region58: #{tpu_custom_call.1} parent=43 // pred_check_branch
          %443 = sbr.rel (%p441) target = $region60
        $region59: #{tpu_custom_call.1} parent=43 // pred_region
          %p444 = scmp.lt.s32.totalorder %s25, 1
          %s445 = scalar_select %p444, %s25, 1
          %s446 = scalar_lea.vmem %s8, %s445
        $region60: #{tpu_custom_call.1} parent=43 // pred_fallthru
          _
        // Predicated region
        $region61: #{tpu_custom_call.1} parent=43 // pred_check
          %p447 = pneg %p254
        $region62: #{tpu_custom_call.1} parent=43 // pred_check_branch
          %449 = sbr.rel (%p447) target = $region64
        $region63: #{tpu_custom_call.1} parent=43 // pred_region
          %s450 = sand.u32 %s244, 1
          %s451 = scalar_lea.sflag [#allocation11], %s450
          %s452 = sand.u32 %s244, 1
          %s453 = smul.addr %s452, 64
          %s454 = scalar_lea.vmem [#allocation10], %s453
          %s456 = ssub.s32 1024, 1024
          %457 = vsyncadd %s451, %s456
          %s458 = smul.addr %s25, 16
          %s459 = smul.addr %s458, 64
          %s460 = scalar_lea.hbm %s9, %s459
          %s461 = sshll.u32 %s454, 4
          %s462 = int_to_ptr.vmem [resolvable:$true] %s461
          %467 = dma.hbm_to_vmem [thread:$0]  %s460, 1024, %s462, %s451, 128, 128, 8
        $region64: #{tpu_custom_call.1} parent=43 // pred_fallthru
          _
        // Predicated region
        $region65: #{tpu_custom_call.1} parent=43 // pred_check
          %p468 = pneg %p280
        $region66: #{tpu_custom_call.1} parent=43 // pred_check_branch
          %470 = sbr.rel (%p468) target = $region68
        $region67: #{tpu_custom_call.1} parent=43 // pred_region
          %p471 = scmp.lt.s32.totalorder %s25, 1
          %s472 = scalar_select %p471, %s25, 1
          %s473 = smul.addr %s472, 16
          %s474 = smul.addr %s473, 4
          %s475 = scalar_lea.vmem %s10, %s474
        $region68: #{tpu_custom_call.1} parent=43 // pred_fallthru
          _
      $region44: #{tpu_custom_call.1} parent=5 // pred_fallthru
        _
      %p476 = scmp.le.s32.totalorder 1, %s25
      %p477 = scmp.lt.s32.totalorder %s25, 3
      %p478 = pnand %p476, %p477
      %p479 = pneg %p478
      // Predicated region
      $region69: #{tpu_custom_call.1} parent=5 // pred_check
        _
      $region70: #{tpu_custom_call.1} parent=5 // pred_check_branch
        %481 = sbr.rel (%p478) target = $region72
      $region71: #{tpu_custom_call.1} parent=5 // pred_region
        %s482 = ssub.s32 %s25, 1
        // Predicated region
        $region73: #{tpu_custom_call.1} parent=71 // pred_check
          %p483 = pneg %p67
        $region74: #{tpu_custom_call.1} parent=71 // pred_check_branch
          %485 = sbr.rel (%p483) target = $region76
        $region75: #{tpu_custom_call.1} parent=71 // pred_region
          %486 = dma.done [#allocation5], 256
        $region76: #{tpu_custom_call.1} parent=71 // pred_fallthru
          _
        // Predicated region
        $region77: #{tpu_custom_call.1} parent=71 // pred_check
          %p487 = pneg %p88
        $region78: #{tpu_custom_call.1} parent=71 // pred_check_branch
          %489 = sbr.rel (%p487) target = $region80
        $region79: #{tpu_custom_call.1} parent=71 // pred_region
          %490 = dma.done [#allocation8], 256
        $region80: #{tpu_custom_call.1} parent=71 // pred_fallthru
          _
        // Predicated region
        $region81: #{tpu_custom_call.1} parent=71 // pred_check
          %p491 = pneg %p130
        $region82: #{tpu_custom_call.1} parent=71 // pred_check_branch
          %493 = sbr.rel (%p491) target = $region84
        $region83: #{tpu_custom_call.1} parent=71 // pred_region
          %494 = dma.done [#allocation8], 512
        $region84: #{tpu_custom_call.1} parent=71 // pred_fallthru
          _
        %s495 = sand.u32 %s247, 1
        %s496 = scalar_lea.sflag [#allocation11], %s495
        %s497 = sand.u32 %s247, 1
        %s498 = smul.addr %s497, 64
        %s499 = scalar_lea.vmem [#allocation10], %s498
        // Predicated region
        $region85: #{tpu_custom_call.1} parent=71 // pred_check
          %p500 = pneg %p260
        $region86: #{tpu_custom_call.1} parent=71 // pred_check_branch
          %502 = sbr.rel (%p500) target = $region88
        $region87: #{tpu_custom_call.1} parent=71 // pred_region
          %503 = dma.done %s496, 1024
        $region88: #{tpu_custom_call.1} parent=71 // pred_fallthru
          _
        %p504 = pneg %p46
        %p505 = pneg %p43
        %p506 = pneg %p67
        %p507 = pneg %p64
        %p508 = pneg %p88
        %p509 = pneg %p85
        %p510 = pneg %p109
        %p511 = pneg %p106
        %p512 = pneg %p130
        %p513 = pneg %p127
        %p514 = scmp.lt.s32.totalorder %s30, 1
        %s515 = scalar_select %p514, %s30, 1
        %s516 = scalar_lea.vmem %s5, %s515
        %p517 = pneg %p156
        %p518 = pneg %p153
        %p519 = scmp.lt.s32.totalorder %s30, 1
        %s520 = scalar_select %p519, %s30, 1
        %s521 = smul.addr %s520, 16
        %s522 = smul.addr %s521, 4
        %s523 = scalar_lea.vmem %s6, %s522
        %p524 = pneg %p182
        %p525 = pneg %p179
        %p526 = scmp.lt.s32.totalorder %s30, 1
        %s527 = scalar_select %p526, %s30, 1
        %s528 = smul.addr %s527, 8
        %s529 = smul.addr %s528, 4
        %s530 = scalar_lea.vmem %s7, %s529
        %p531 = pneg %p208
        %p532 = pneg %p205
        %p533 = scmp.lt.s32.totalorder %s30, 1
        %s534 = scalar_select %p533, %s30, 1
        %s535 = scalar_lea.vmem %s8, %s534
        %p536 = pneg %p234
        %p537 = pneg %p231
        %s538 = sand.u32 %s247, 1
        %s539 = scalar_lea.sflag [#allocation11], %s538
        %s540 = sand.u32 %s247, 1
        %s541 = smul.addr %s540, 64
        %s542 = scalar_lea.vmem [#allocation10], %s541
        %p543 = pneg %p260
        %p544 = pneg %p257
        %p545 = scmp.lt.s32.totalorder %s30, 1
        %s546 = scalar_select %p545, %s30, 1
        %s547 = smul.addr %s546, 16
        %s548 = smul.addr %s547, 4
        %s549 = scalar_lea.vmem %s10, %s548
        %p550 = pneg %p286
        %p551 = pneg %p283
        %p552 = pneg %p307
        %p553 = pneg %p304
        %p554 = pneg %p328
        %p555 = pneg %p325
        %p556 = pneg %p349
        %p557 = pneg %p346
        %p558 = scmp.lt.s32.totalorder %s30, 1
        %s559 = scalar_select %p558, %s30, 1
        %s560 = scalar_lea.vmem %s5, %s559
        %p561 = scmp.lt.s32.totalorder %s30, 1
        %s562 = scalar_select %p561, %s30, 1
        %s563 = smul.addr %s562, 16
        %s564 = smul.addr %s563, 4
        %s565 = scalar_lea.vmem %s6, %s564
        %p566 = scmp.lt.s32.totalorder %s30, 1
        %s567 = scalar_select %p566, %s30, 1
        %s568 = smul.addr %s567, 8
        %s569 = smul.addr %s568, 4
        %s570 = scalar_lea.vmem %s7, %s569
        %p571 = scmp.lt.s32.totalorder %s30, 1
        %s572 = scalar_select %p571, %s30, 1
        %s573 = scalar_lea.vmem %s8, %s572
        %p574 = scmp.lt.s32.totalorder %s30, 1
        %s575 = scalar_select %p574, %s30, 1
        %s576 = smul.addr %s575, 16
        %s577 = smul.addr %s576, 4
        %s578 = scalar_lea.vmem %s10, %s577
        %p580 = scmp.eq.s32.totalorder %s30, 0
        // Predicated region
        $region89: #{tpu_custom_call.1} parent=71 // pred_check
          %p581 = pneg %p580
        $region90: #{tpu_custom_call.1} parent=71 // pred_check_branch
          %583 = sbr.rel (%p581) target = $region92
        $region91: #{tpu_custom_call.1} parent=71 // pred_region
          %v584 = vld [vmem:[%s0] sm:$0xff]
          %v585 = vld [vmem:[%s0 + $0x8] sm:$0xff]
          %vm586 = vcmask 523264
          %587 = vst.msk [vmem:[#allocation2] sm:$0xff] %vm586, %v584
          %588 = vst.msk [vmem:[#allocation2 + $0x8] sm:$0xff] %vm586, %v585
          %v589 = vlaneseq
          %v590 = vshrl.u32 %v589, 7
          %v591 = vlaneseq
          %v592 = vand.u32 %v591, 127
          %vm593 = vcmp.ge.s32.totalorder %v590, %v592
          %v594 = vld [vmem:[%s3] sm:$0x1]
          %v595 = vld [vmem:[%s3 + $0x1] sm:$0x1]
          %vm596 = vcmp.gt.f32.partialorder %v594, 0.5
          %vm597 = vcmp.gt.f32.partialorder %v595, 0.5
          %v598 = vsel %vm596, 1, 0
          %v599 = vsel %vm597, 1, 0
          %v600 = vlaneseq
          %v601 = vshrl.u32 %v600, 7
          %v602 = vsub.s32 0, %v601
          %v603 = vrot.slane %v598, %v602
          %v604 = vlaneseq
          %v605 = vshrl.u32 %v604, 7
          %v606 = vsub.s32 0, %v605
          %v607 = vrot.slane %v599, %v606
          %vm608 = vcmp.eq.s32.totalorder %v603, 1
          %vm609 = vcmp.eq.s32.totalorder %v607, 1
          %vm610 = vmand %vm593, %vm608
          %vm611 = vmand %vm593, %vm609
          %v612 = vsel %vm610, 0.0, -1e+30
          %v613 = vsel %vm611, 0.0, -1e+30
          %vm614 = vcmask 64512
          %615 = vst.msk [vmem:[#allocation3] sm:$0xff] %vm614, %v612
          %616 = vst.msk [vmem:[#allocation3 + $0x8] sm:$0xff] %vm614, %v613
        $region92: #{tpu_custom_call.1} parent=71 // pred_fallthru
          _
        %v617 = vld [vmem:[#allocation2] sm:$0xff]
        %v618 = vld [vmem:[#allocation2 + $0x8] sm:$0xff]
        %v619 = vld [vmem:[#allocation4] sm:$0xff]
        %v620 = vld [vmem:[#allocation4 + $0x8] sm:$0xff]
        %v621 = vld [vmem:[#allocation7] sm:$0xff]
        %v622 = vld [vmem:[#allocation7 + $0x8] sm:$0xff]
        %v623 = vld [vmem:[#allocation3] sm:$0xff]
        %v624 = vld [vmem:[#allocation3 + $0x8] sm:$0xff]
        %v625 = vmul.f32 %v617, %v617
        %v626 = vmul.f32 %v618, %v618
        %vm627 = vcmask 523264
        %v628 = vsel %vm627, %v625, 0.0
        %629 = vadd.xlane.f32.xlu0 %v628
        %v630 = vpop.xlane.xlu0 %629
        %v631 = vsel %vm627, %v626, 0.0
        %632 = vadd.xlane.f32.xlu0 %v631
        %v633 = vpop.xlane.xlu0 %632
        %v634 = vrcp.pop 64.0
        %v635 = vmul.f32 %v630, %v634
        %v636 = vmul.f32 %v633, %v634
        %v637 = vadd.f32 %v635, 1e-06
        %v638 = vadd.f32 %v636, 1e-06
        %v639 = vrsqrt.pop %v637
        %v640 = vrsqrt.pop %v638
        %v641 = vmul.f32 %v617, %v639
        %v642 = vmul.f32 %v618, %v640
        %v643 = vld [vmem:[%s560] sm:$0x1]
        %v645 = vlaneseq
        %v646 = vshrl.u32 %v645, 7
        %v647 = vsub.s32 0, %v646
        %v648 = vrot.slane %v643, %v647
        %v650 = vmul.f32 %v641, %v648
        %v651 = vmul.f32 %v642, %v648
        %v652 = vpack.c.bf16 %v651, %v650
        %v653 = vld [vmem:[%s565] sm:$0xff]
        %v654 = vld [vmem:[%s565 + $0x8] sm:$0xff]
        %v655 = vld [vmem:[%s565 + $0x10] sm:$0xff]
        %v656 = vld [vmem:[%s565 + $0x18] sm:$0xff]
        %v657 = vld [vmem:[%s565 + $0x20] sm:$0xff]
        %v658 = vld [vmem:[%s565 + $0x28] sm:$0xff]
        %v659 = vld [vmem:[%s565 + $0x30] sm:$0xff]
        %v660 = vld [vmem:[%s565 + $0x38] sm:$0xff]
        %v669 = vunpack.c.l.b16 %v653
        %v670 = vunpack.c.h.b16 %v653
        %v671 = vunpack.c.l.b16 %v654
        %v672 = vunpack.c.h.b16 %v654
        %v673 = vunpack.c.l.b16 %v655
        %v674 = vunpack.c.h.b16 %v655
        %v675 = vunpack.c.l.b16 %v656
        %v676 = vunpack.c.h.b16 %v656
        %v677 = vunpack.c.l.b16 %v657
        %v678 = vunpack.c.h.b16 %v657
        %v679 = vunpack.c.l.b16 %v658
        %v680 = vunpack.c.h.b16 %v658
        %v681 = vunpack.c.l.b16 %v659
        %v682 = vunpack.c.h.b16 %v659
        %v683 = vunpack.c.l.b16 %v660
        %v684 = vunpack.c.h.b16 %v660
        %v685 = vpack.c.b16 %v671, %v669
        %v686 = vpack.c.b16 %v672, %v670
        %v687 = vpack.c.b16 %v675, %v673
        %v688 = vpack.c.b16 %v676, %v674
        %v689 = vpack.c.b16 %v679, %v677
        %v690 = vpack.c.b16 %v680, %v678
        %v691 = vpack.c.b16 %v683, %v681
        %v692 = vpack.c.b16 %v684, %v682
        %v702 = vsel %vm627, %v652, 0
        %704 = vmatprep.subr.bf16.mxu0 %v686
        %705 = vmatpush1.bf16.msra.mxu0 %v685
        %706 = vmatprep.subr.bf16.mxu0 %v688
        %707 = vmatpush1.bf16.msra.mxu0 %v687
        %708 = vmatprep.subr.bf16.mxu0 %v690
        %709 = vmatpush1.bf16.msra.mxu0 %v689
        %710 = vmatprep.subr.bf16.mxu0 %v692
        %711 = vmatpush1.bf16.msra.mxu0 %v691
        %712 = vmatprep.subr.bf16.mxu0 0
        %713 = vmatpush1.bf16.msra.mxu0 0
        %714 = vmatprep.subr.bf16.mxu0 0
        %715 = vmatpush1.bf16.msra.mxu0 0
        %716 = vmatprep.subr.bf16.mxu0 0
        %717 = vmatpush1.bf16.msra.mxu0 0
        %718 = vmatprep.subr.bf16.mxu0 0
        %719 = vmatpush1.bf16.msra.mxu0 0
        %720 = vmatprep.subr.bf16.mxu0 0
        %721 = vmatpush1.bf16.msra.mxu0 0
        %722 = vmatprep.subr.bf16.mxu0 0
        %723 = vmatpush1.bf16.msra.mxu0 0
        %724 = vmatprep.subr.bf16.mxu0 0
        %725 = vmatpush1.bf16.msra.mxu0 0
        %726 = vmatprep.subr.bf16.mxu0 0
        %727 = vmatpush1.bf16.msra.mxu0 0
        %728 = vmatprep.subr.bf16.mxu0 0
        %729 = vmatpush1.bf16.msra.mxu0 0
        %730 = vmatprep.subr.bf16.mxu0 0
        %731 = vmatpush1.bf16.msra.mxu0 0
        %732 = vmatprep.subr.bf16.mxu0 0
        %733 = vmatpush1.bf16.msra.mxu0 0
        %734 = vmatprep.subr.bf16.mxu0 0
        %735 = vmatpush1.bf16.msra.mxu0 0
        %736 = vmatprep.mubr.bf16.mxu0 0
        %737 = vmatmul.mubr.bf16.gmra.mrb[0].mxu0 %v702
        %v738 = vpop.f32.mrb[0].mxu0
        %v739 = vadd.f32 0.0, %v738
        %v740 = vpop.f32.mrb[0].mxu0
        %v741 = vadd.f32 0.0, %v740
        %v742 = vpop.f32.mrb[0].mxu0
        %v743 = vadd.f32 0.0, %v742
        %v744 = vpop.f32.mrb[0].mxu0
        %v745 = vadd.f32 0.0, %v744
        %746 = vdwg.mxu0
        %v747 = vld [vmem:[#allocation9] sm:$0xf]
        %v748 = vld [vmem:[#allocation9 + $0x4] sm:$0xf]
        %v749 = vld [vmem:[#allocation9 + $0x8] sm:$0xf]
        %v750 = vld [vmem:[#allocation9 + $0xc] sm:$0xf]
        %v751 = vld [vmem:[#allocation9 + $0x10] sm:$0xf]
        %v752 = vld [vmem:[#allocation9 + $0x14] sm:$0xf]
        %v753 = vld [vmem:[#allocation9 + $0x18] sm:$0xf]
        %v754 = vld [vmem:[#allocation9 + $0x1c] sm:$0xf]
        %v755 = vpack.c.bf16 %v743, %v739
        %v764 = vunpack.c.l.b16 %v747
        %v765 = vunpack.c.l.b16 %v748
        %v766 = vunpack.c.l.b16 %v749
        %v767 = vunpack.c.l.b16 %v750
        %v768 = vunpack.c.l.b16 %v751
        %v769 = vunpack.c.l.b16 %v752
        %v770 = vunpack.c.l.b16 %v753
        %v771 = vunpack.c.l.b16 %v754
        %v772 = vpack.c.b16 %v765, %v764
        %v773 = vpack.c.b16 %v767, %v766
        %v774 = vpack.c.b16 %v769, %v768
        %v775 = vpack.c.b16 %v771, %v770
        %v781 = vsel %vm627, %v755, 0
        %783 = vmatprep.subr.bf16.mxu0 0
        %784 = vmatpush1.bf16.msra.mxu0 %v772
        %785 = vmatprep.subr.bf16.mxu0 0
        %786 = vmatpush1.bf16.msra.mxu0 %v773
        %787 = vmatprep.subr.bf16.mxu0 0
        %788 = vmatpush1.bf16.msra.mxu0 %v774
        %789 = vmatprep.subr.bf16.mxu0 0
        %790 = vmatpush1.bf16.msra.mxu0 %v775
        %791 = vmatprep.subr.bf16.mxu0 0
        %792 = vmatpush1.bf16.msra.mxu0 0
        %793 = vmatprep.subr.bf16.mxu0 0
        %794 = vmatpush1.bf16.msra.mxu0 0
        %795 = vmatprep.subr.bf16.mxu0 0
        %796 = vmatpush1.bf16.msra.mxu0 0
        %797 = vmatprep.subr.bf16.mxu0 0
        %798 = vmatpush1.bf16.msra.mxu0 0
        %799 = vmatprep.subr.bf16.mxu0 0
        %800 = vmatpush1.bf16.msra.mxu0 0
        %801 = vmatprep.subr.bf16.mxu0 0
        %802 = vmatpush1.bf16.msra.mxu0 0
        %803 = vmatprep.subr.bf16.mxu0 0
        %804 = vmatpush1.bf16.msra.mxu0 0
        %805 = vmatprep.subr.bf16.mxu0 0
        %806 = vmatpush1.bf16.msra.mxu0 0
        %807 = vmatprep.subr.bf16.mxu0 0
        %808 = vmatpush1.bf16.msra.mxu0 0
        %809 = vmatprep.subr.bf16.mxu0 0
        %810 = vmatpush1.bf16.msra.mxu0 0
        %811 = vmatprep.subr.bf16.mxu0 0
        %812 = vmatpush1.bf16.msra.mxu0 0
        %813 = vmatprep.subr.bf16.mxu0 0
        %814 = vmatpush1.bf16.msra.mxu0 0
        %815 = vmatprep.mubr.bf16.mxu0 0
        %816 = vmatmul.mubr.bf16.gmra.mrb[0].mxu0 %v781
        %v817 = vpop.f32.mrb[0].mxu0
        %v818 = vadd.f32 0.0, %v817
        %v819 = vpop.f32.mrb[0].mxu0
        %v820 = vpop.f32.mrb[0].mxu0
        %v821 = vadd.f32 0.0, %v820
        %v822 = vpop.f32.mrb[0].mxu0
        %823 = vdwg.mxu0
        %825 = vrot.lane.b32.xlu0 %v755, 64
        %v826 = vpop.permute.xlu0 %825
        %v828 = vsel %vm627, %v826, 0
        %830 = vmatprep.subr.bf16.mxu0 0
        %831 = vmatpush1.bf16.msra.mxu0 %v772
        %832 = vmatprep.subr.bf16.mxu0 0
        %833 = vmatpush1.bf16.msra.mxu0 %v773
        %834 = vmatprep.subr.bf16.mxu0 0
        %835 = vmatpush1.bf16.msra.mxu0 %v774
        %836 = vmatprep.subr.bf16.mxu0 0
        %837 = vmatpush1.bf16.msra.mxu0 %v775
        %838 = vmatprep.subr.bf16.mxu0 0
        %839 = vmatpush1.bf16.msra.mxu0 0
        %840 = vmatprep.subr.bf16.mxu0 0
        %841 = vmatpush1.bf16.msra.mxu0 0
        %842 = vmatprep.subr.bf16.mxu0 0
        %843 = vmatpush1.bf16.msra.mxu0 0
        %844 = vmatprep.subr.bf16.mxu0 0
        %845 = vmatpush1.bf16.msra.mxu0 0
        %846 = vmatprep.subr.bf16.mxu0 0
        %847 = vmatpush1.bf16.msra.mxu0 0
        %848 = vmatprep.subr.bf16.mxu0 0
        %849 = vmatpush1.bf16.msra.mxu0 0
        %850 = vmatprep.subr.bf16.mxu0 0
        %851 = vmatpush1.bf16.msra.mxu0 0
        %852 = vmatprep.subr.bf16.mxu0 0
        %853 = vmatpush1.bf16.msra.mxu0 0
        %854 = vmatprep.subr.bf16.mxu0 0
        %855 = vmatpush1.bf16.msra.mxu0 0
        %856 = vmatprep.subr.bf16.mxu0 0
        %857 = vmatpush1.bf16.msra.mxu0 0
        %858 = vmatprep.subr.bf16.mxu0 0
        %859 = vmatpush1.bf16.msra.mxu0 0
        %860 = vmatprep.subr.bf16.mxu0 0
        %861 = vmatpush1.bf16.msra.mxu0 0
        %862 = vmatprep.mubr.bf16.mxu0 0
        %863 = vmatmul.mubr.bf16.gmra.mrb[0].mxu0 %v828
        %v864 = vpop.f32.mrb[0].mxu0
        %v865 = vadd.f32 0.0, %v864
        %v866 = vpop.f32.mrb[0].mxu0
        %v867 = vpop.f32.mrb[0].mxu0
        %v868 = vadd.f32 0.0, %v867
        %v869 = vpop.f32.mrb[0].mxu0
        %870 = vdwg.mxu0
        %v871 = vmul.f32 %v739, %v619
        %v872 = vmul.f32 %v743, %v620
        %v873 = vmul.f32 %v818, %v621
        %v874 = vmul.f32 %v821, %v622
        %v875 = vadd.f32 %v871, %v873
        %v876 = vadd.f32 %v872, %v874
        %879 = vrot.lane.b32.xlu0 %v619, 64
        %v880 = vpop.permute.xlu0 %879
        %881 = vrot.lane.b32.xlu0 %v620, 64
        %v882 = vpop.permute.xlu0 %881
        %v885 = vmul.f32 %v739, %v880
        %v886 = vmul.f32 %v743, %v882
        %v887 = vmul.f32 %v865, %v621
        %v888 = vmul.f32 %v868, %v622
        %891 = vrot.lane.b32.xlu0 %v887, 64
        %v892 = vpop.permute.xlu0 %891
        %893 = vrot.lane.b32.xlu0 %v888, 64
        %v894 = vpop.permute.xlu0 %893
        %v897 = vadd.f32 %v885, %v892
        %v898 = vadd.f32 %v886, %v894
        %v899 = vpack.c.bf16 %v875, %v875
        %v900 = vpack.c.bf16 %v876, %v876
        %v901 = vpack.c.bf16 %v897, %v897
        %v902 = vpack.c.bf16 %v898, %v898
        %904 = vrot.lane.b32.xlu0 %v901, 64
        %v905 = vpop.permute.xlu0 %904
        %vm906 = vcmask 261120
        %v908 = vsel %vm906, %v899, 0
        %v911 = vsel %vm906, %v905, 0
        %913 = vmatprep.subr.bf16.mxu0 0
        %914 = vmatpush1.bf16.xpose.msra.mxu0 %v911
        %915 = vmatprep.subr.bf16.mxu0 0
        %916 = vmatpush1.bf16.xpose.msra.mxu0 0
        %917 = vmatprep.subr.bf16.mxu0 0
        %918 = vmatpush1.bf16.xpose.msra.mxu0 0
        %919 = vmatprep.subr.bf16.mxu0 0
        %920 = vmatpush1.bf16.xpose.msra.mxu0 0
        %921 = vmatprep.subr.bf16.mxu0 0
        %922 = vmatpush1.bf16.xpose.msra.mxu0 0
        %923 = vmatprep.subr.bf16.mxu0 0
        %924 = vmatpush1.bf16.xpose.msra.mxu0 0
        %925 = vmatprep.subr.bf16.mxu0 0
        %926 = vmatpush1.bf16.xpose.msra.mxu0 0
        %927 = vmatprep.subr.bf16.mxu0 0
        %928 = vmatpush1.bf16.xpose.msra.mxu0 0
        %929 = vmatprep.subr.bf16.mxu0 0
        %930 = vmatpush1.bf16.xpose.msra.mxu0 0
        %931 = vmatprep.subr.bf16.mxu0 0
        %932 = vmatpush1.bf16.xpose.msra.mxu0 0
        %933 = vmatprep.subr.bf16.mxu0 0
        %934 = vmatpush1.bf16.xpose.msra.mxu0 0
        %935 = vmatprep.subr.bf16.mxu0 0
        %936 = vmatpush1.bf16.xpose.msra.mxu0 0
        %937 = vmatprep.subr.bf16.mxu0 0
        %938 = vmatpush1.bf16.xpose.msra.mxu0 0
        %939 = vmatprep.subr.bf16.mxu0 0
        %940 = vmatpush1.bf16.xpose.msra.mxu0 0
        %941 = vmatprep.subr.bf16.mxu0 0
        %942 = vmatpush1.bf16.xpose.msra.mxu0 0
        %943 = vmatprep.subr.bf16.mxu0 0
        %944 = vmatpush1.bf16.xpose.msra.mxu0 0
        %945 = vmatprep.mubr.bf16.mxu0 0
        %946 = vmatmul.mubr.bf16.gmra.mrb[0].mxu0 %v908
        %v947 = vpop.f32.mrb[0].mxu0
        %v948 = vadd.f32 %v623, %v947
        %v949 = vpop.f32.mrb[0].mxu0
        %v950 = vpop.f32.mrb[0].mxu0
        %v951 = vpop.f32.mrb[0].mxu0
        %952 = vdwg.mxu0
        %954 = vrot.lane.b32.xlu0 %v902, 64
        %v955 = vpop.permute.xlu0 %954
        %v957 = vsel %vm906, %v900, 0
        %v960 = vsel %vm906, %v955, 0
        %962 = vmatprep.subr.bf16.mxu0 0
        %963 = vmatpush1.bf16.xpose.msra.mxu0 %v960
        %964 = vmatprep.subr.bf16.mxu0 0
        %965 = vmatpush1.bf16.xpose.msra.mxu0 0
        %966 = vmatprep.subr.bf16.mxu0 0
        %967 = vmatpush1.bf16.xpose.msra.mxu0 0
        %968 = vmatprep.subr.bf16.mxu0 0
        %969 = vmatpush1.bf16.xpose.msra.mxu0 0
        %970 = vmatprep.subr.bf16.mxu0 0
        %971 = vmatpush1.bf16.xpose.msra.mxu0 0
        %972 = vmatprep.subr.bf16.mxu0 0
        %973 = vmatpush1.bf16.xpose.msra.mxu0 0
        %974 = vmatprep.subr.bf16.mxu0 0
        %975 = vmatpush1.bf16.xpose.msra.mxu0 0
        %976 = vmatprep.subr.bf16.mxu0 0
        %977 = vmatpush1.bf16.xpose.msra.mxu0 0
        %978 = vmatprep.subr.bf16.mxu0 0
        %979 = vmatpush1.bf16.xpose.msra.mxu0 0
        %980 = vmatprep.subr.bf16.mxu0 0
        %981 = vmatpush1.bf16.xpose.msra.mxu0 0
        %982 = vmatprep.subr.bf16.mxu0 0
        %983 = vmatpush1.bf16.xpose.msra.mxu0 0
        %984 = vmatprep.subr.bf16.mxu0 0
        %985 = vmatpush1.bf16.xpose.msra.mxu0 0
        %986 = vmatprep.subr.bf16.mxu0 0
        %987 = vmatpush1.bf16.xpose.msra.mxu0 0
        %988 = vmatprep.subr.bf16.mxu0 0
        %989 = vmatpush1.bf16.xpose.msra.mxu0 0
        %990 = vmatprep.subr.bf16.mxu0 0
        %991 = vmatpush1.bf16.xpose.msra.mxu0 0
        %992 = vmatprep.subr.bf16.mxu0 0
        %993 = vmatpush1.bf16.xpose.msra.mxu0 0
        %994 = vmatprep.mubr.bf16.mxu0 0
        %995 = vmatmul.mubr.bf16.gmra.mrb[0].mxu0 %v957
        %v996 = vpop.f32.mrb[0].mxu0
        %v997 = vadd.f32 %v624, %v996
        %v998 = vpop.f32.mrb[0].mxu0
        %v999 = vpop.f32.mrb[0].mxu0
        %v1000 = vpop.f32.mrb[0].mxu0
        %1001 = vdwg.mxu0
        %vm1002 = vcmask 64512
        %v1003 = vsel %vm1002, %v948, -inf
        %1004 = vmax.xlane.f32.xlu0 %v1003
        %v1005 = vpop.xlane.xlu0 %1004
        %v1006 = vsel %vm1002, %v997, -inf
        %1007 = vmax.xlane.f32.xlu0 %v1006
        %v1008 = vpop.xlane.xlu0 %1007
        %v1009 = vsub.f32 %v948, %v1005
        %v1010 = vsub.f32 %v997, %v1008
        %v1011 = vmul.f32 %v1009, 1.442695
        %v1012 = vpow.pop %v1011
        %v1013 = vmul.f32 %v1010, 1.442695
        %v1014 = vpow.pop %v1013
        %v1015 = vsel %vm1002, %v1012, 0.0
        %1016 = vadd.xlane.f32.xlu0 %v1015
        %v1017 = vpop.xlane.xlu0 %1016
        %v1018 = vsel %vm1002, %v1014, 0.0
        %1019 = vadd.xlane.f32.xlu0 %v1018
        %v1020 = vpop.xlane.xlu0 %1019
        %v1021 = vmax.f32 %v1017, 1e-30
        %v1022 = vmax.f32 %v1020, 1e-30
        %v1023 = vrcp.pop %v1021
        %v1024 = vrcp.pop %v1022
        %v1025 = vmul.f32 %v1012, %v1023
        %v1026 = vmul.f32 %v1014, %v1024
        %v1027 = vpack.c.bf16 %v1025, %v1025
        %v1028 = vpack.c.bf16 %v1026, %v1026
        %v1029 = vpack.c.bf16 %v741, %v741
        %v1030 = vpack.c.bf16 %v745, %v745
        %v1032 = vsel %vm1002, %v1027, 0
        %vm1034 = vcmask 1043456
        %v1036 = vsel %vm1034, %v1029, 0
        %1038 = vmatprep.subr.bf16.mxu0 0
        %1039 = vmatpush1.bf16.msra.mxu0 %v1036
        %1040 = vmatprep.subr.bf16.mxu0 0
        %1041 = vmatpush1.bf16.msra.mxu0 0
        %1042 = vmatprep.subr.bf16.mxu0 0
        %1043 = vmatpush1.bf16.msra.mxu0 0
        %1044 = vmatprep.subr.bf16.mxu0 0
        %1045 = vmatpush1.bf16.msra.mxu0 0
        %1046 = vmatprep.subr.bf16.mxu0 0
        %1047 = vmatpush1.bf16.msra.mxu0 0
        %1048 = vmatprep.subr.bf16.mxu0 0
        %1049 = vmatpush1.bf16.msra.mxu0 0
        %1050 = vmatprep.subr.bf16.mxu0 0
        %1051 = vmatpush1.bf16.msra.mxu0 0
        %1052 = vmatprep.subr.bf16.mxu0 0
        %1053 = vmatpush1.bf16.msra.mxu0 0
        %1054 = vmatprep.subr.bf16.mxu0 0
        %1055 = vmatpush1.bf16.msra.mxu0 0
        %1056 = vmatprep.subr.bf16.mxu0 0
        %1057 = vmatpush1.bf16.msra.mxu0 0
        %1058 = vmatprep.subr.bf16.mxu0 0
        %1059 = vmatpush1.bf16.msra.mxu0 0
        %1060 = vmatprep.subr.bf16.mxu0 0
        %1061 = vmatpush1.bf16.msra.mxu0 0
        %1062 = vmatprep.subr.bf16.mxu0 0
        %1063 = vmatpush1.bf16.msra.mxu0 0
        %1064 = vmatprep.subr.bf16.mxu0 0
        %1065 = vmatpush1.bf16.msra.mxu0 0
        %1066 = vmatprep.subr.bf16.mxu0 0
        %1067 = vmatpush1.bf16.msra.mxu0 0
        %1068 = vmatprep.subr.bf16.mxu0 0
        %1069 = vmatpush1.bf16.msra.mxu0 0
        %1070 = vmatprep.mubr.bf16.mxu0 0
        %1071 = vmatmul.mubr.bf16.gmra.mrb[0].mxu0 %v1032
        %v1072 = vpop.f32.mrb[0].mxu0
        %v1073 = vadd.f32 0.0, %v1072
        %v1074 = vpop.f32.mrb[0].mxu0
        %v1075 = vpop.f32.mrb[0].mxu0
        %v1076 = vpop.f32.mrb[0].mxu0
        %1077 = vdwg.mxu0
        %v1079 = vsel %vm1002, %v1028, 0
        %v1082 = vsel %vm1034, %v1030, 0
        %1084 = vmatprep.subr.bf16.mxu0 0
        %1085 = vmatpush1.bf16.msra.mxu0 %v1082
        %1086 = vmatprep.subr.bf16.mxu0 0
        %1087 = vmatpush1.bf16.msra.mxu0 0
        %1088 = vmatprep.subr.bf16.mxu0 0
        %1089 = vmatpush1.bf16.msra.mxu0 0
        %1090 = vmatprep.subr.bf16.mxu0 0
        %1091 = vmatpush1.bf16.msra.mxu0 0
        %1092 = vmatprep.subr.bf16.mxu0 0
        %1093 = vmatpush1.bf16.msra.mxu0 0
        %1094 = vmatprep.subr.bf16.mxu0 0
        %1095 = vmatpush1.bf16.msra.mxu0 0
        %1096 = vmatprep.subr.bf16.mxu0 0
        %1097 = vmatpush1.bf16.msra.mxu0 0
        %1098 = vmatprep.subr.bf16.mxu0 0
        %1099 = vmatpush1.bf16.msra.mxu0 0
        %1100 = vmatprep.subr.bf16.mxu0 0
        %1101 = vmatpush1.bf16.msra.mxu0 0
        %1102 = vmatprep.subr.bf16.mxu0 0
        %1103 = vmatpush1.bf16.msra.mxu0 0
        %1104 = vmatprep.subr.bf16.mxu0 0
        %1105 = vmatpush1.bf16.msra.mxu0 0
        %1106 = vmatprep.subr.bf16.mxu0 0
        %1107 = vmatpush1.bf16.msra.mxu0 0
        %1108 = vmatprep.subr.bf16.mxu0 0
        %1109 = vmatpush1.bf16.msra.mxu0 0
        %1110 = vmatprep.subr.bf16.mxu0 0
        %1111 = vmatpush1.bf16.msra.mxu0 0
        %1112 = vmatprep.subr.bf16.mxu0 0
        %1113 = vmatpush1.bf16.msra.mxu0 0
        %1114 = vmatprep.subr.bf16.mxu0 0
        %1115 = vmatpush1.bf16.msra.mxu0 0
        %1116 = vmatprep.mubr.bf16.mxu0 0
        %1117 = vmatmul.mubr.bf16.gmra.mrb[0].mxu0 %v1079
        %v1118 = vpop.f32.mrb[0].mxu0
        %v1119 = vadd.f32 0.0, %v1118
        %v1120 = vpop.f32.mrb[0].mxu0
        %v1121 = vpop.f32.mrb[0].mxu0
        %v1122 = vpop.f32.mrb[0].mxu0
        %1123 = vdwg.mxu0
        %1124 = vrot.lane.b32.xlu0 %v619, 32
        %v1125 = vpop.permute.xlu0 %1124
        %1126 = vrot.lane.b32.xlu0 %v620, 32
        %v1127 = vpop.permute.xlu0 %1126
        %v1130 = vmul.f32 %v739, %v1125
        %v1131 = vmul.f32 %v743, %v1127
        %1134 = vrot.lane.b32.xlu0 %v621, 32
        %v1135 = vpop.permute.xlu0 %1134
        %1136 = vrot.lane.b32.xlu0 %v622, 32
        %v1137 = vpop.permute.xlu0 %1136
        %v1140 = vmul.f32 %v818, %v1135
        %v1141 = vmul.f32 %v821, %v1137
        %v1142 = vadd.f32 %v1130, %v1140
        %v1143 = vadd.f32 %v1131, %v1141
        %1144 = vrot.lane.b32.xlu0 %v619, 96
        %v1145 = vpop.permute.xlu0 %1144
        %1146 = vrot.lane.b32.xlu0 %v620, 96
        %v1147 = vpop.permute.xlu0 %1146
        %v1150 = vmul.f32 %v739, %v1145
        %v1151 = vmul.f32 %v743, %v1147
        %v1152 = vmul.f32 %v865, %v1135
        %v1153 = vmul.f32 %v868, %v1137
        %1156 = vrot.lane.b32.xlu0 %v1152, 64
        %v1157 = vpop.permute.xlu0 %1156
        %1158 = vrot.lane.b32.xlu0 %v1153, 64
        %v1159 = vpop.permute.xlu0 %1158
        %v1162 = vadd.f32 %v1150, %v1157
        %v1163 = vadd.f32 %v1151, %v1159
        %v1164 = vpack.c.bf16 %v1142, %v1142
        %v1165 = vpack.c.bf16 %v1143, %v1143
        %v1166 = vpack.c.bf16 %v1162, %v1162
        %v1167 = vpack.c.bf16 %v1163, %v1163
        %1169 = vrot.lane.b32.xlu0 %v1164, 96
        %v1170 = vpop.permute.xlu0 %1169
        %1172 = vrot.lane.b32.xlu0 %v1166, 32
        %v1173 = vpop.permute.xlu0 %1172
        %v1175 = vsel %vm906, %v1170, 0
        %v1178 = vsel %vm906, %v1173, 0
        %1180 = vmatprep.subr.bf16.mxu0 0
        %1181 = vmatpush1.bf16.xpose.msra.mxu0 %v1178
        %1182 = vmatprep.subr.bf16.mxu0 0
        %1183 = vmatpush1.bf16.xpose.msra.mxu0 0
        %1184 = vmatprep.subr.bf16.mxu0 0
        %1185 = vmatpush1.bf16.xpose.msra.mxu0 0
        %1186 = vmatprep.subr.bf16.mxu0 0
        %1187 = vmatpush1.bf16.xpose.msra.mxu0 0
        %1188 = vmatprep.subr.bf16.mxu0 0
        %1189 = vmatpush1.bf16.xpose.msra.mxu0 0
        %1190 = vmatprep.subr.bf16.mxu0 0
        %1191 = vmatpush1.bf16.xpose.msra.mxu0 0
        %1192 = vmatprep.subr.bf16.mxu0 0
        %1193 = vmatpush1.bf16.xpose.msra.mxu0 0
        %1194 = vmatprep.subr.bf16.mxu0 0
        %1195 = vmatpush1.bf16.xpose.msra.mxu0 0
        %1196 = vmatprep.subr.bf16.mxu0 0
        %1197 = vmatpush1.bf16.xpose.msra.mxu0 0
        %1198 = vmatprep.subr.bf16.mxu0 0
        %1199 = vmatpush1.bf16.xpose.msra.mxu0 0
        %1200 = vmatprep.subr.bf16.mxu0 0
        %1201 = vmatpush1.bf16.xpose.msra.mxu0 0
        %1202 = vmatprep.subr.bf16.mxu0 0
        %1203 = vmatpush1.bf16.xpose.msra.mxu0 0
        %1204 = vmatprep.subr.bf16.mxu0 0
        %1205 = vmatpush1.bf16.xpose.msra.mxu0 0
        %1206 = vmatprep.subr.bf16.mxu0 0
        %1207 = vmatpush1.bf16.xpose.msra.mxu0 0
        %1208 = vmatprep.subr.bf16.mxu0 0
        %1209 = vmatpush1.bf16.xpose.msra.mxu0 0
        %1210 = vmatprep.subr.bf16.mxu0 0
        %1211 = vmatpush1.bf16.xpose.msra.mxu0 0
        %1212 = vmatprep.mubr.bf16.mxu0 0
        %1213 = vmatmul.mubr.bf16.gmra.mrb[0].mxu0 %v1175
        %v1214 = vpop.f32.mrb[0].mxu0
        %v1215 = vadd.f32 %v623, %v1214
        %v1216 = vpop.f32.mrb[0].mxu0
        %v1217 = vpop.f32.mrb[0].mxu0
        %v1218 = vpop.f32.mrb[0].mxu0
        %1219 = vdwg.mxu0
        %1221 = vrot.lane.b32.xlu0 %v1165, 96
        %v1222 = vpop.permute.xlu0 %1221
        %1224 = vrot.lane.b32.xlu0 %v1167, 32
        %v1225 = vpop.permute.xlu0 %1224
        %v1227 = vsel %vm906, %v1222, 0
        %v1230 = vsel %vm906, %v1225, 0
        %1232 = vmatprep.subr.bf16.mxu0 0
        %1233 = vmatpush1.bf16.xpose.msra.mxu0 %v1230
        %1234 = vmatprep.subr.bf16.mxu0 0
        %1235 = vmatpush1.bf16.xpose.msra.mxu0 0
        %1236 = vmatprep.subr.bf16.mxu0 0
        %1237 = vmatpush1.bf16.xpose.msra.mxu0 0
        %1238 = vmatprep.subr.bf16.mxu0 0
        %1239 = vmatpush1.bf16.xpose.msra.mxu0 0
        %1240 = vmatprep.subr.bf16.mxu0 0
        %1241 = vmatpush1.bf16.xpose.msra.mxu0 0
        %1242 = vmatprep.subr.bf16.mxu0 0
        %1243 = vmatpush1.bf16.xpose.msra.mxu0 0
        %1244 = vmatprep.subr.bf16.mxu0 0
        %1245 = vmatpush1.bf16.xpose.msra.mxu0 0
        %1246 = vmatprep.subr.bf16.mxu0 0
        %1247 = vmatpush1.bf16.xpose.msra.mxu0 0
        %1248 = vmatprep.subr.bf16.mxu0 0
        %1249 = vmatpush1.bf16.xpose.msra.mxu0 0
        %1250 = vmatprep.subr.bf16.mxu0 0
        %1251 = vmatpush1.bf16.xpose.msra.mxu0 0
        %1252 = vmatprep.subr.bf16.mxu0 0
        %1253 = vmatpush1.bf16.xpose.msra.mxu0 0
        %1254 = vmatprep.subr.bf16.mxu0 0
        %1255 = vmatpush1.bf16.xpose.msra.mxu0 0
        %1256 = vmatprep.subr.bf16.mxu0 0
        %1257 = vmatpush1.bf16.xpose.msra.mxu0 0
        %1258 = vmatprep.subr.bf16.mxu0 0
        %1259 = vmatpush1.bf16.xpose.msra.mxu0 0
        %1260 = vmatprep.subr.bf16.mxu0 0
        %1261 = vmatpush1.bf16.xpose.msra.mxu0 0
        %1262 = vmatprep.subr.bf16.mxu0 0
        %1263 = vmatpush1.bf16.xpose.msra.mxu0 0
        %1264 = vmatprep.mubr.bf16.mxu0 0
        %1265 = vmatmul.mubr.bf16.gmra.mrb[0].mxu0 %v1227
        %v1266 = vpop.f32.mrb[0].mxu0
        %v1267 = vadd.f32 %v624, %v1266
        %v1268 = vpop.f32.mrb[0].mxu0
        %v1269 = vpop.f32.mrb[0].mxu0
        %v1270 = vpop.f32.mrb[0].mxu0
        %1271 = vdwg.mxu0
        %v1272 = vsel %vm1002, %v1215, -inf
        %1273 = vmax.xlane.f32.xlu0 %v1272
        %v1274 = vpop.xlane.xlu0 %1273
        %v1275 = vsel %vm1002, %v1267, -inf
        %1276 = vmax.xlane.f32.xlu0 %v1275
        %v1277 = vpop.xlane.xlu0 %1276
        %v1278 = vsub.f32 %v1215, %v1274
        %v1279 = vsub.f32 %v1267, %v1277
        %v1280 = vmul.f32 %v1278, 1.442695
        %v1281 = vpow.pop %v1280
        %v1282 = vmul.f32 %v1279, 1.442695
        %v1283 = vpow.pop %v1282
        %v1284 = vsel %vm1002, %v1281, 0.0
        %1285 = vadd.xlane.f32.xlu0 %v1284
        %v1286 = vpop.xlane.xlu0 %1285
        %v1287 = vsel %vm1002, %v1283, 0.0
        %1288 = vadd.xlane.f32.xlu0 %v1287
        %v1289 = vpop.xlane.xlu0 %1288
        %v1290 = vmax.f32 %v1286, 1e-30
        %v1291 = vmax.f32 %v1289, 1e-30
        %v1292 = vrcp.pop %v1290
        %v1293 = vrcp.pop %v1291
        %v1294 = vmul.f32 %v1281, %v1292
        %v1295 = vmul.f32 %v1283, %v1293
        %v1296 = vpack.c.bf16 %v1294, %v1294
        %v1297 = vpack.c.bf16 %v1295, %v1295
        %1299 = vrot.lane.b32.xlu0 %v1029, 96
        %v1300 = vpop.permute.xlu0 %1299
        %v1302 = vsel %vm1002, %v1296, 0
        %v1305 = vsel %vm1034, %v1300, 0
        %1307 = vmatprep.subr.bf16.mxu0 0
        %1308 = vmatpush1.bf16.msra.mxu0 %v1305
        %1309 = vmatprep.subr.bf16.mxu0 0
        %1310 = vmatpush1.bf16.msra.mxu0 0
        %1311 = vmatprep.subr.bf16.mxu0 0
        %1312 = vmatpush1.bf16.msra.mxu0 0
        %1313 = vmatprep.subr.bf16.mxu0 0
        %1314 = vmatpush1.bf16.msra.mxu0 0
        %1315 = vmatprep.subr.bf16.mxu0 0
        %1316 = vmatpush1.bf16.msra.mxu0 0
        %1317 = vmatprep.subr.bf16.mxu0 0
        %1318 = vmatpush1.bf16.msra.mxu0 0
        %1319 = vmatprep.subr.bf16.mxu0 0
        %1320 = vmatpush1.bf16.msra.mxu0 0
        %1321 = vmatprep.subr.bf16.mxu0 0
        %1322 = vmatpush1.bf16.msra.mxu0 0
        %1323 = vmatprep.subr.bf16.mxu0 0
        %1324 = vmatpush1.bf16.msra.mxu0 0
        %1325 = vmatprep.subr.bf16.mxu0 0
        %1326 = vmatpush1.bf16.msra.mxu0 0
        %1327 = vmatprep.subr.bf16.mxu0 0
        %1328 = vmatpush1.bf16.msra.mxu0 0
        %1329 = vmatprep.subr.bf16.mxu0 0
        %1330 = vmatpush1.bf16.msra.mxu0 0
        %1331 = vmatprep.subr.bf16.mxu0 0
        %1332 = vmatpush1.bf16.msra.mxu0 0
        %1333 = vmatprep.subr.bf16.mxu0 0
        %1334 = vmatpush1.bf16.msra.mxu0 0
        %1335 = vmatprep.subr.bf16.mxu0 0
        %1336 = vmatpush1.bf16.msra.mxu0 0
        %1337 = vmatprep.subr.bf16.mxu0 0
        %1338 = vmatpush1.bf16.msra.mxu0 0
        %1339 = vmatprep.mubr.bf16.mxu0 0
        %1340 = vmatmul.mubr.bf16.gmra.mrb[0].mxu0 %v1302
        %v1341 = vpop.f32.mrb[0].mxu0
        %v1342 = vadd.f32 0.0, %v1341
        %v1343 = vpop.f32.mrb[0].mxu0
        %v1344 = vpop.f32.mrb[0].mxu0
        %v1345 = vpop.f32.mrb[0].mxu0
        %1346 = vdwg.mxu0
        %1348 = vrot.lane.b32.xlu0 %v1030, 96
        %v1349 = vpop.permute.xlu0 %1348
        %v1351 = vsel %vm1002, %v1297, 0
        %v1354 = vsel %vm1034, %v1349, 0
        %1356 = vmatprep.subr.bf16.mxu0 0
        %1357 = vmatpush1.bf16.msra.mxu0 %v1354
        %1358 = vmatprep.subr.bf16.mxu0 0
        %1359 = vmatpush1.bf16.msra.mxu0 0
        %1360 = vmatprep.subr.bf16.mxu0 0
        %1361 = vmatpush1.bf16.msra.mxu0 0
        %1362 = vmatprep.subr.bf16.mxu0 0
        %1363 = vmatpush1.bf16.msra.mxu0 0
        %1364 = vmatprep.subr.bf16.mxu0 0
        %1365 = vmatpush1.bf16.msra.mxu0 0
        %1366 = vmatprep.subr.bf16.mxu0 0
        %1367 = vmatpush1.bf16.msra.mxu0 0
        %1368 = vmatprep.subr.bf16.mxu0 0
        %1369 = vmatpush1.bf16.msra.mxu0 0
        %1370 = vmatprep.subr.bf16.mxu0 0
        %1371 = vmatpush1.bf16.msra.mxu0 0
        %1372 = vmatprep.subr.bf16.mxu0 0
        %1373 = vmatpush1.bf16.msra.mxu0 0
        %1374 = vmatprep.subr.bf16.mxu0 0
        %1375 = vmatpush1.bf16.msra.mxu0 0
        %1376 = vmatprep.subr.bf16.mxu0 0
        %1377 = vmatpush1.bf16.msra.mxu0 0
        %1378 = vmatprep.subr.bf16.mxu0 0
        %1379 = vmatpush1.bf16.msra.mxu0 0
        %1380 = vmatprep.subr.bf16.mxu0 0
        %1381 = vmatpush1.bf16.msra.mxu0 0
        %1382 = vmatprep.subr.bf16.mxu0 0
        %1383 = vmatpush1.bf16.msra.mxu0 0
        %1384 = vmatprep.subr.bf16.mxu0 0
        %1385 = vmatpush1.bf16.msra.mxu0 0
        %1386 = vmatprep.subr.bf16.mxu0 0
        %1387 = vmatpush1.bf16.msra.mxu0 0
        %1388 = vmatprep.mubr.bf16.mxu0 0
        %1389 = vmatmul.mubr.bf16.gmra.mrb[0].mxu0 %v1351
        %v1390 = vpop.f32.mrb[0].mxu0
        %v1391 = vadd.f32 0.0, %v1390
        %v1392 = vpop.f32.mrb[0].mxu0
        %v1393 = vpop.f32.mrb[0].mxu0
        %v1394 = vpop.f32.mrb[0].mxu0
        %1395 = vdwg.mxu0
        %1398 = vrot.lane.b32.xlu0 %v1342, 32
        %v1399 = vpop.permute.xlu0 %1398
        %1400 = vrot.lane.b32.xlu0 %v1391, 32
        %v1401 = vpop.permute.xlu0 %1400
        %v1404 = vsel %vm906, %v1073, %v1399
        %v1405 = vsel %vm906, %v1119, %v1401
        %v1406 = vpack.c.bf16 %v1405, %v1404
        %v1407 = vld [vmem:[%s570] sm:$0xf]
        %v1408 = vld [vmem:[%s570 + $0x4] sm:$0xf]
        %v1409 = vld [vmem:[%s570 + $0x8] sm:$0xf]
        %v1410 = vld [vmem:[%s570 + $0xc] sm:$0xf]
        %v1411 = vld [vmem:[%s570 + $0x10] sm:$0xf]
        %v1412 = vld [vmem:[%s570 + $0x14] sm:$0xf]
        %v1413 = vld [vmem:[%s570 + $0x18] sm:$0xf]
        %v1414 = vld [vmem:[%s570 + $0x1c] sm:$0xf]
        %v1423 = vunpack.c.l.b16 %v1407
        %v1424 = vunpack.c.l.b16 %v1408
        %v1425 = vunpack.c.l.b16 %v1409
        %v1426 = vunpack.c.l.b16 %v1410
        %v1427 = vunpack.c.l.b16 %v1411
        %v1428 = vunpack.c.l.b16 %v1412
        %v1429 = vunpack.c.l.b16 %v1413
        %v1430 = vunpack.c.l.b16 %v1414
        %v1431 = vpack.c.b16 %v1424, %v1423
        %v1432 = vpack.c.b16 %v1426, %v1425
        %v1433 = vpack.c.b16 %v1428, %v1427
        %v1434 = vpack.c.b16 %v1430, %v1429
        %v1440 = vsel %vm627, %v1406, 0
        %1442 = vmatprep.subr.bf16.mxu0 0
        %1443 = vmatpush1.bf16.msra.mxu0 %v1431
        %1444 = vmatprep.subr.bf16.mxu0 0
        %1445 = vmatpush1.bf16.msra.mxu0 %v1432
        %1446 = vmatprep.subr.bf16.mxu0 0
        %1447 = vmatpush1.bf16.msra.mxu0 %v1433
        %1448 = vmatprep.subr.bf16.mxu0 0
        %1449 = vmatpush1.bf16.msra.mxu0 %v1434
        %1450 = vmatprep.subr.bf16.mxu0 0
        %1451 = vmatpush1.bf16.msra.mxu0 0
        %1452 = vmatprep.subr.bf16.mxu0 0
        %1453 = vmatpush1.bf16.msra.mxu0 0
        %1454 = vmatprep.subr.bf16.mxu0 0
        %1455 = vmatpush1.bf16.msra.mxu0 0
        %1456 = vmatprep.subr.bf16.mxu0 0
        %1457 = vmatpush1.bf16.msra.mxu0 0
        %1458 = vmatprep.subr.bf16.mxu0 0
        %1459 = vmatpush1.bf16.msra.mxu0 0
        %1460 = vmatprep.subr.bf16.mxu0 0
        %1461 = vmatpush1.bf16.msra.mxu0 0
        %1462 = vmatprep.subr.bf16.mxu0 0
        %1463 = vmatpush1.bf16.msra.mxu0 0
        %1464 = vmatprep.subr.bf16.mxu0 0
        %1465 = vmatpush1.bf16.msra.mxu0 0
        %1466 = vmatprep.subr.bf16.mxu0 0
        %1467 = vmatpush1.bf16.msra.mxu0 0
        %1468 = vmatprep.subr.bf16.mxu0 0
        %1469 = vmatpush1.bf16.msra.mxu0 0
        %1470 = vmatprep.subr.bf16.mxu0 0
        %1471 = vmatpush1.bf16.msra.mxu0 0
        %1472 = vmatprep.subr.bf16.mxu0 0
        %1473 = vmatpush1.bf16.msra.mxu0 0
        %1474 = vmatprep.mubr.bf16.mxu0 0
        %1475 = vmatmul.mubr.bf16.gmra.mrb[0].mxu0 %v1440
        %v1476 = vpop.f32.mrb[0].mxu0
        %v1477 = vadd.f32 0.0, %v1476
        %v1478 = vpop.f32.mrb[0].mxu0
        %v1479 = vpop.f32.mrb[0].mxu0
        %v1480 = vadd.f32 0.0, %v1479
        %v1481 = vpop.f32.mrb[0].mxu0
        %1482 = vdwg.mxu0
        %v1483 = vadd.f32 %v617, %v1477
        %v1484 = vadd.f32 %v618, %v1480
        %v1485 = vmul.f32 %v1483, %v1483
        %v1486 = vmul.f32 %v1484, %v1484
        %v1487 = vsel %vm627, %v1485, 0.0
        %1488 = vadd.xlane.f32.xlu0 %v1487
        %v1489 = vpop.xlane.xlu0 %1488
        %v1490 = vsel %vm627, %v1486, 0.0
        %1491 = vadd.xlane.f32.xlu0 %v1490
        %v1492 = vpop.xlane.xlu0 %1491
        %v1493 = vmul.f32 %v1489, %v634
        %v1494 = vmul.f32 %v1492, %v634
        %v1495 = vadd.f32 %v1493, 1e-06
        %v1496 = vadd.f32 %v1494, 1e-06
        %v1497 = vrsqrt.pop %v1495
        %v1498 = vrsqrt.pop %v1496
        %v1499 = vmul.f32 %v1483, %v1497
        %v1500 = vmul.f32 %v1484, %v1498
        %v1501 = vld [vmem:[%s573] sm:$0x1]
        %v1503 = vlaneseq
        %v1504 = vshrl.u32 %v1503, 7
        %v1505 = vsub.s32 0, %v1504
        %v1506 = vrot.slane %v1501, %v1505
        %v1508 = vmul.f32 %v1499, %v1506
        %v1509 = vmul.f32 %v1500, %v1506
        %v1510 = vpack.c.bf16 %v1509, %v1508
        %v1511 = vld [vmem:[%s499] sm:$0xff]
        %v1512 = vld [vmem:[%s499 + $0x8] sm:$0xff]
        %v1513 = vld [vmem:[%s499 + $0x10] sm:$0xff]
        %v1514 = vld [vmem:[%s499 + $0x18] sm:$0xff]
        %v1515 = vld [vmem:[%s499 + $0x20] sm:$0xff]
        %v1516 = vld [vmem:[%s499 + $0x28] sm:$0xff]
        %v1517 = vld [vmem:[%s499 + $0x30] sm:$0xff]
        %v1518 = vld [vmem:[%s499 + $0x38] sm:$0xff]
        %v1527 = vunpack.c.l.b16 %v1511
        %v1528 = vunpack.c.h.b16 %v1511
        %v1529 = vunpack.c.l.b16 %v1512
        %v1530 = vunpack.c.h.b16 %v1512
        %v1531 = vunpack.c.l.b16 %v1513
        %v1532 = vunpack.c.h.b16 %v1513
        %v1533 = vunpack.c.l.b16 %v1514
        %v1534 = vunpack.c.h.b16 %v1514
        %v1535 = vunpack.c.l.b16 %v1515
        %v1536 = vunpack.c.h.b16 %v1515
        %v1537 = vunpack.c.l.b16 %v1516
        %v1538 = vunpack.c.h.b16 %v1516
        %v1539 = vunpack.c.l.b16 %v1517
        %v1540 = vunpack.c.h.b16 %v1517
        %v1541 = vunpack.c.l.b16 %v1518
        %v1542 = vunpack.c.h.b16 %v1518
        %v1543 = vpack.c.b16 %v1529, %v1527
        %v1544 = vpack.c.b16 %v1530, %v1528
        %v1545 = vpack.c.b16 %v1533, %v1531
        %v1546 = vpack.c.b16 %v1534, %v1532
        %v1547 = vpack.c.b16 %v1537, %v1535
        %v1548 = vpack.c.b16 %v1538, %v1536
        %v1549 = vpack.c.b16 %v1541, %v1539
        %v1550 = vpack.c.b16 %v1542, %v1540
        %v1560 = vsel %vm627, %v1510, 0
        %1562 = vmatprep.subr.bf16.mxu0 %v1544
        %1563 = vmatpush1.bf16.msra.mxu0 %v1543
        %1564 = vmatprep.subr.bf16.mxu0 %v1546
        %1565 = vmatpush1.bf16.msra.mxu0 %v1545
        %1566 = vmatprep.subr.bf16.mxu0 %v1548
        %1567 = vmatpush1.bf16.msra.mxu0 %v1547
        %1568 = vmatprep.subr.bf16.mxu0 %v1550
        %1569 = vmatpush1.bf16.msra.mxu0 %v1549
        %1570 = vmatprep.subr.bf16.mxu0 0
        %1571 = vmatpush1.bf16.msra.mxu0 0
        %1572 = vmatprep.subr.bf16.mxu0 0
        %1573 = vmatpush1.bf16.msra.mxu0 0
        %1574 = vmatprep.subr.bf16.mxu0 0
        %1575 = vmatpush1.bf16.msra.mxu0 0
        %1576 = vmatprep.subr.bf16.mxu0 0
        %1577 = vmatpush1.bf16.msra.mxu0 0
        %1578 = vmatprep.subr.bf16.mxu0 0
        %1579 = vmatpush1.bf16.msra.mxu0 0
        %1580 = vmatprep.subr.bf16.mxu0 0
        %1581 = vmatpush1.bf16.msra.mxu0 0
        %1582 = vmatprep.subr.bf16.mxu0 0
        %1583 = vmatpush1.bf16.msra.mxu0 0
        %1584 = vmatprep.subr.bf16.mxu0 0
        %1585 = vmatpush1.bf16.msra.mxu0 0
        %1586 = vmatprep.subr.bf16.mxu0 0
        %1587 = vmatpush1.bf16.msra.mxu0 0
        %1588 = vmatprep.subr.bf16.mxu0 0
        %1589 = vmatpush1.bf16.msra.mxu0 0
        %1590 = vmatprep.subr.bf16.mxu0 0
        %1591 = vmatpush1.bf16.msra.mxu0 0
        %1592 = vmatprep.subr.bf16.mxu0 0
        %1593 = vmatpush1.bf16.msra.mxu0 0
        %1594 = vmatprep.mubr.bf16.mxu0 0
        %1595 = vmatmul.mubr.bf16.gmra.mrb[0].mxu0 %v1560
        %v1596 = vpop.f32.mrb[0].mxu0
        %v1597 = vadd.f32 0.0, %v1596
        %v1598 = vpop.f32.mrb[0].mxu0
        %v1599 = vadd.f32 0.0, %v1598
        %v1600 = vpop.f32.mrb[0].mxu0
        %v1601 = vadd.f32 0.0, %v1600
        %v1602 = vpop.f32.mrb[0].mxu0
        %v1603 = vadd.f32 0.0, %v1602
        %1604 = vdwg.mxu0
        %v1605 = vxor.u32 %v1597, 2147483648
        %v1606 = vxor.u32 %v1601, 2147483648
        %v1607 = vmul.f32 %v1605, 1.442695
        %v1608 = vpow.pop %v1607
        %v1609 = vmul.f32 %v1606, 1.442695
        %v1610 = vpow.pop %v1609
        %v1611 = vadd.f32 %v1608, 1.0
        %v1612 = vadd.f32 %v1610, 1.0
        %v1613 = vrcp.pop %v1611
        %v1614 = vmul.f32 1.0, %v1613
        %v1615 = vrcp.pop %v1612
        %v1616 = vmul.f32 1.0, %v1615
        %v1617 = vmul.f32 %v1597, %v1614
        %v1618 = vmul.f32 %v1601, %v1616
        %v1619 = vmul.f32 %v1617, %v1599
        %v1620 = vmul.f32 %v1618, %v1603
        %v1621 = vpack.c.bf16 %v1620, %v1619
        %v1622 = vld [vmem:[%s578] sm:$0xf]
        %v1623 = vld [vmem:[%s578 + $0x4] sm:$0xf]
        %v1624 = vld [vmem:[%s578 + $0x8] sm:$0xf]
        %v1625 = vld [vmem:[%s578 + $0xc] sm:$0xf]
        %v1626 = vld [vmem:[%s578 + $0x10] sm:$0xf]
        %v1627 = vld [vmem:[%s578 + $0x14] sm:$0xf]
        %v1628 = vld [vmem:[%s578 + $0x18] sm:$0xf]
        %v1629 = vld [vmem:[%s578 + $0x1c] sm:$0xf]
        %v1630 = vld [vmem:[%s578 + $0x20] sm:$0xf]
        %v1631 = vld [vmem:[%s578 + $0x24] sm:$0xf]
        %v1632 = vld [vmem:[%s578 + $0x28] sm:$0xf]
        %v1633 = vld [vmem:[%s578 + $0x2c] sm:$0xf]
        %v1634 = vld [vmem:[%s578 + $0x30] sm:$0xf]
        %v1635 = vld [vmem:[%s578 + $0x34] sm:$0xf]
        %v1636 = vld [vmem:[%s578 + $0x38] sm:$0xf]
        %v1637 = vld [vmem:[%s578 + $0x3c] sm:$0xf]
        %v1654 = vunpack.c.l.b16 %v1622
        %v1655 = vunpack.c.l.b16 %v1623
        %v1656 = vunpack.c.l.b16 %v1624
        %v1657 = vunpack.c.l.b16 %v1625
        %v1658 = vunpack.c.l.b16 %v1626
        %v1659 = vunpack.c.l.b16 %v1627
        %v1660 = vunpack.c.l.b16 %v1628
        %v1661 = vunpack.c.l.b16 %v1629
        %v1662 = vunpack.c.l.b16 %v1630
        %v1663 = vunpack.c.l.b16 %v1631
        %v1664 = vunpack.c.l.b16 %v1632
        %v1665 = vunpack.c.l.b16 %v1633
        %v1666 = vunpack.c.l.b16 %v1634
        %v1667 = vunpack.c.l.b16 %v1635
        %v1668 = vunpack.c.l.b16 %v1636
        %v1669 = vunpack.c.l.b16 %v1637
        %v1670 = vpack.c.b16 %v1655, %v1654
        %v1671 = vpack.c.b16 %v1657, %v1656
        %v1672 = vpack.c.b16 %v1659, %v1658
        %v1673 = vpack.c.b16 %v1661, %v1660
        %v1674 = vpack.c.b16 %v1663, %v1662
        %v1675 = vpack.c.b16 %v1665, %v1664
        %v1676 = vpack.c.b16 %v1667, %v1666
        %v1677 = vpack.c.b16 %v1669, %v1668
        %1686 = vmatprep.subr.bf16.mxu0 0
        %1687 = vmatpush1.bf16.msra.mxu0 %v1670
        %1688 = vmatprep.subr.bf16.mxu0 0
        %1689 = vmatpush1.bf16.msra.mxu0 %v1671
        %1690 = vmatprep.subr.bf16.mxu0 0
        %1691 = vmatpush1.bf16.msra.mxu0 %v1672
        %1692 = vmatprep.subr.bf16.mxu0 0
        %1693 = vmatpush1.bf16.msra.mxu0 %v1673
        %1694 = vmatprep.subr.bf16.mxu0 0
        %1695 = vmatpush1.bf16.msra.mxu0 %v1674
        %1696 = vmatprep.subr.bf16.mxu0 0
        %1697 = vmatpush1.bf16.msra.mxu0 %v1675
        %1698 = vmatprep.subr.bf16.mxu0 0
        %1699 = vmatpush1.bf16.msra.mxu0 %v1676
        %1700 = vmatprep.subr.bf16.mxu0 0
        %1701 = vmatpush1.bf16.msra.mxu0 %v1677
        %1702 = vmatprep.subr.bf16.mxu0 0
        %1703 = vmatpush1.bf16.msra.mxu0 0
        %1704 = vmatprep.subr.bf16.mxu0 0
        %1705 = vmatpush1.bf16.msra.mxu0 0
        %1706 = vmatprep.subr.bf16.mxu0 0
        %1707 = vmatpush1.bf16.msra.mxu0 0
        %1708 = vmatprep.subr.bf16.mxu0 0
        %1709 = vmatpush1.bf16.msra.mxu0 0
        %1710 = vmatprep.subr.bf16.mxu0 0
        %1711 = vmatpush1.bf16.msra.mxu0 0
        %1712 = vmatprep.subr.bf16.mxu0 0
        %1713 = vmatpush1.bf16.msra.mxu0 0
        %1714 = vmatprep.subr.bf16.mxu0 0
        %1715 = vmatpush1.bf16.msra.mxu0 0
        %1716 = vmatprep.subr.bf16.mxu0 0
        %1717 = vmatpush1.bf16.msra.mxu0 0
        %1718 = vmatprep.mubr.bf16.mxu0 0
        %1719 = vmatmul.mubr.bf16.gmra.mrb[0].mxu0 %v1621
        %v1720 = vpop.f32.mrb[0].mxu0
        %v1721 = vadd.f32 0.0, %v1720
        %v1722 = vpop.f32.mrb[0].mxu0
        %v1723 = vpop.f32.mrb[0].mxu0
        %v1724 = vadd.f32 0.0, %v1723
        %v1725 = vpop.f32.mrb[0].mxu0
        %1726 = vdwg.mxu0
        %v1727 = vadd.f32 %v1483, %v1721
        %v1728 = vadd.f32 %v1484, %v1724
        %1729 = vst.msk [vmem:[#allocation2] sm:$0xff] %vm627, %v1727
        %1730 = vst.msk [vmem:[#allocation2 + $0x8] sm:$0xff] %vm627, %v1728
        %p1731 = scmp.eq.s32.totalorder %s30, 1
        // Predicated region
        $region93: #{tpu_custom_call.1} parent=71 // pred_check
          %p1732 = pneg %p1731
        $region94: #{tpu_custom_call.1} parent=71 // pred_check_branch
          %1734 = sbr.rel (%p1732) target = $region96
        $region95: #{tpu_custom_call.1} parent=71 // pred_region
          %v1735 = vsel %vm627, %v1727, 0.0
          %1736 = vadd.xlane.f32.xlu0 %v1735
          %v1737 = vpop.xlane.xlu0 %1736
          %v1738 = vsel %vm627, %v1728, 0.0
          %1739 = vadd.xlane.f32.xlu0 %v1738
          %v1740 = vpop.xlane.xlu0 %1739
          %v1741 = vmul.f32 %v1737, %v634
          %v1742 = vmul.f32 %v1740, %v634
          %v1743 = vsub.f32 %v1727, %v1741
          %v1744 = vsub.f32 %v1728, %v1742
          %v1745 = vmul.f32 %v1743, %v1743
          %v1746 = vmul.f32 %v1744, %v1744
          %v1747 = vsel %vm627, %v1745, 0.0
          %1748 = vadd.xlane.f32.xlu0 %v1747
          %v1749 = vpop.xlane.xlu0 %1748
          %v1750 = vsel %vm627, %v1746, 0.0
          %1751 = vadd.xlane.f32.xlu0 %v1750
          %v1752 = vpop.xlane.xlu0 %1751
          %v1753 = vmul.f32 %v1749, %v634
          %v1754 = vmul.f32 %v1752, %v634
          %v1755 = vadd.f32 %v1753, 1e-05
          %v1756 = vadd.f32 %v1754, 1e-05
          %v1757 = vrsqrt.pop %v1755
          %v1758 = vrsqrt.pop %v1756
          %v1759 = vmul.f32 %v1743, %v1757
          %v1760 = vmul.f32 %v1744, %v1758
          %v1761 = vld [vmem:[%s11] sm:$0x1]
          %v1763 = vlaneseq
          %v1764 = vshrl.u32 %v1763, 7
          %v1765 = vsub.s32 0, %v1764
          %v1766 = vrot.slane %v1761, %v1765
          %v1768 = vmul.f32 %v1759, %v1766
          %v1769 = vmul.f32 %v1760, %v1766
          %v1770 = vld [vmem:[%s12] sm:$0x1]
          %v1772 = vlaneseq
          %v1773 = vshrl.u32 %v1772, 7
          %v1774 = vsub.s32 0, %v1773
          %v1775 = vrot.slane %v1770, %v1774
          %v1777 = vadd.f32 %v1768, %v1775
          %v1778 = vadd.f32 %v1769, %v1775
          %1779 = vst.msk [vmem:[#allocation12] sm:$0xff] %vm627, %v1777
          %1780 = vst.msk [vmem:[#allocation12 + $0x8] sm:$0xff] %vm627, %v1778
        $region96: #{tpu_custom_call.1} parent=71 // pred_fallthru
          _
        // Predicated region
        $region97: #{tpu_custom_call.1} parent=71 // pred_check
          %p1781 = pneg %p346
        $region98: #{tpu_custom_call.1} parent=71 // pred_check_branch
          %1783 = sbr.rel (%p1781) target = $region100
        $region99: #{tpu_custom_call.1} parent=71 // pred_region
          %s1785 = ssub.s32 256, 256
          %1786 = vsyncadd [#allocation6], %s1785
          %s1787 = sshll.u32 [#allocation12], 4
          %s1788 = int_to_ptr.vmem [resolvable:$true] %s1787
          %1793 = dma.vmem_to_hbm [thread:$0]  %s1788, 256, %s13, [#allocation6], 128, 128, 8
        $region100: #{tpu_custom_call.1} parent=71 // pred_fallthru
          _
        // Predicated region
        $region101: #{tpu_custom_call.1} parent=71 // pred_check
          %p1794 = pneg %p346
        $region102: #{tpu_custom_call.1} parent=71 // pred_check_branch
          %1796 = sbr.rel (%p1794) target = $region104
        $region103: #{tpu_custom_call.1} parent=71 // pred_region
          %1797 = dma.done [#allocation6], 256
        $region104: #{tpu_custom_call.1} parent=71 // pred_fallthru
          _
      $region72: #{tpu_custom_call.1} parent=5 // pred_fallthru
        _
      %p1798 = scmp.le.s32.totalorder 2, %s25
      // Predicated region
      $region105: #{tpu_custom_call.1} parent=5 // pred_check
        %p1799 = pneg %p1798
      $region106: #{tpu_custom_call.1} parent=5 // pred_check_branch
        %1801 = sbr.rel (%p1799) target = $region108
      $region107: #{tpu_custom_call.1} parent=5 // pred_region
        %s1802 = ssub.s32 %s25, 2
      $region108: #{tpu_custom_call.1} parent=5 // pred_fallthru
        _
    $region6: #{tpu_custom_call.1} parent=1 // loop_footer
      %s29 = sadd.s32 1, %s25
    $region7: #{tpu_custom_call.1} parent=1 // loop_footer_branch
      %24 = sbr.rel target = $region3
    $region8: #{tpu_custom_call.1} parent=1 // loop_exit
      _
    %1803 = vsyncpa [#allocation5], 1
    %s1804 = scalar_lea.sflag [#allocation5], 1
    %1805 = vsyncpa %s1804, 1
    %1806 = vsyncpa [#allocation8], 1
    %1807 = vsyncpa [#allocation11], 1
    %s1808 = scalar_lea.sflag [#allocation11], 1
    %1809 = vsyncpa %s1808, 1
    %1810 = vsyncpa [#allocation6], 1
    %s1811 = scalar_lea.sflag [#allocation6], 1
    %1812 = vsyncpa %s1811, 1

</llo_original>
